<compile_context>
chip_gen: v6e
topology: v6e:2x2x1
jax: 0.10.0
libtpu: 0.0.40
codegen_flags: <defaults>
</compile_context>

<pallas_src>
import jax
import jax.numpy as jnp
import numpy as np
from jax import lax
from jax.experimental import pallas as pl
from jax.experimental.pallas import tpu as pltpu


# ----------------------------- Pallas kernel -----------------------------

def _res_graph_conv_kernel(
    x_ref,                      # (TB_step, J, Cin)
    dbig_ref,                   # (ROWS, 1)     diag(softmax(adj)) tiled per sample
    abig_ref,                   # (ROWS, ROWS)  I_TB (x) offdiag(softmax(adj))
    w10_ref, w11_ref,           # (Cin, H), (Cin, H)
    s1_ref, t1_ref,             # (1, H)        folded BN1 scale / (shift + bias1*scale)
    w20_ref, w21_ref,           # (H, Cout), (H, Cout)
    s2_ref, t2_ref,             # (1, Cout)
    o_ref,                      # (TB_step, J, Cout)
):
    tb_step, J, Cin = x_ref.shape
    rows = dbig_ref.shape[0]
    tb_inner = rows // J
    groups = tb_step // tb_inner
    Cout = s2_ref.shape[1]

    # Grid-invariant operands: load once, reuse across the row-group loop.
    d = dbig_ref[...]
    a = abig_ref[...]
    w10 = w10_ref[...]
    w11 = w11_ref[...]
    s1 = s1_ref[...]
    t1 = t1_ref[...]
    w20 = w20_ref[...]
    w21 = w21_ref[...]
    s2 = s2_ref[...]
    t2 = t2_ref[...]

    def body(g, carry):
        base = pl.multiple_of(g * tb_inner, tb_inner)
        xf = x_ref[pl.ds(base, tb_inner), :, :].reshape(rows, Cin)   # leading-dim merge

        # ---- layer 1: SemGraphConv (adjacency-first) + BN + ReLU ----
        ax = jnp.dot(a, xf, preferred_element_type=jnp.float32)           # (rows, Cin)
        y1 = (jnp.dot(d * xf, w10, preferred_element_type=jnp.float32)
              + jnp.dot(ax, w11, preferred_element_type=jnp.float32))     # (rows, H)
        y1 = jnp.maximum(y1 * s1 + t1, 0.0)

        # ---- layer 2: SemGraphConv (weights-first, H > Cout) + BN + ReLU ----
        g0 = jnp.dot(y1, w20, preferred_element_type=jnp.float32)         # (rows, Cout)
        g1 = jnp.dot(y1, w21, preferred_element_type=jnp.float32)         # (rows, Cout)
        y2 = d * g0 + jnp.dot(a, g1, preferred_element_type=jnp.float32)
        y2 = jnp.maximum(y2 * s2 + t2, 0.0)

        # ---- residual ----
        o_ref[pl.ds(base, tb_inner), :, :] = (xf + y2).reshape(tb_inner, J, Cout)
        return carry

    lax.fori_loop(0, groups, body, 0, unroll=True)


# ----------------------------- wrapper -----------------------------

def res_graph_conv(x, d_big, a_big, w10, w11, s1, t1, w20, w21, s2, t2,
                   *, target_steps=2):
    """x: (B, J, Cin).  d_big: (ROWS, 1), a_big: (ROWS, ROWS) from fuse_adjacency."""
    B, J, Cin = x.shape
    rows = d_big.shape[0]
    tb_inner = rows // J
    H = s1.shape[1]
    Cout = s2.shape[1]
    assert Cin == Cout, "residual add requires input_dim == output_dim"
    assert d_big.shape == (rows, 1) and a_big.shape == (rows, rows)

    groups_total = pl.cdiv(B, tb_inner)
    steps = max(1, min(target_steps, groups_total))
    groups_per_step = pl.cdiv(groups_total, steps)
    tb_step = groups_per_step * tb_inner
    B_pad = steps * tb_step

    x_in = x
    if B_pad != B:  # only emit the pad when actually required
        x_in = jnp.concatenate(
            [x, jnp.zeros((B_pad - B, J, Cin), x.dtype)], axis=0)

    full = lambda shape: pl.BlockSpec(shape, lambda b: (0,) * len(shape))

    out = pl.pallas_call(
        _res_graph_conv_kernel,
        out_shape=jax.ShapeDtypeStruct((B_pad, J, Cout), jnp.float32),
        grid=(steps,),
        in_specs=[
            pl.BlockSpec((tb_step, J, Cin), lambda b: (b, 0, 0)),  # x slab
            full((rows, 1)),                                       # diag scale
            full((rows, rows)),                                    # block-diag off-diag adj
            full((Cin, H)), full((Cin, H)),                        # W10, W11
            full((1, H)), full((1, H)),                            # bn1 scale, shift(+bias)
            full((H, Cout)), full((H, Cout)),                      # W20, W21
            full((1, Cout)), full((1, Cout)),                      # bn2 scale, shift(+bias)
        ],
        out_specs=pl.BlockSpec((tb_step, J, Cout), lambda b: (b, 0, 0)),
        compiler_params=pltpu.CompilerParams(
            dimension_semantics=("parallel",)),
    )(x_in, d_big, a_big, w10, w11, s1, t1, w20, w21, s2, t2)

    return out if B_pad == B else out[:B]


# ----------------------------- parameter setup (parameter-only glue) -----------------------------

def fuse_adjacency(adj, e_val=1.0, tb_inner=8):
    """SemGraphConv adjacency: -9e15 where adj<=0, e where adj>0, row-softmax,
    then split into a per-sample-tiled diagonal vector and a block-diagonal
    (I_tb (x) off-diagonal) matrix, both precomputed once."""
    mask = adj > 0
    logits = jnp.where(mask, jnp.full_like(adj, e_val), jnp.full_like(adj, -9e15))
    a = jax.nn.softmax(logits, axis=1)
    eye = jnp.eye(adj.shape[0], dtype=a.dtype)
    d_big = jnp.tile(jnp.diagonal(a), (tb_inner,))[:, None]             # (tb*J, 1)
    a_big = jnp.kron(jnp.eye(tb_inner, dtype=a.dtype), a * (1.0 - eye))  # (tb*J, tb*J)
    return d_big, a_big


def fuse_layer(b, gamma, beta, mean, var, eps=1e-5):
    """Fold BN (eval) and the SemGraphConv bias into a scale/shift pair."""
    scale = gamma / jnp.sqrt(var + eps)
    shift = beta - mean * scale + b * scale
    return scale[None, :], shift[None, :]


def xavier(key, shape, gain=1.414):
    fan_in, fan_out = shape[-2], shape[-1]
    bound = gain * np.sqrt(6.0 / (fan_in + fan_out))
    return jax.random.uniform(key, shape, jnp.float32, -bound, bound)


# ----------------------------- reference (pure JAX, unfused math) -----------------------------

def _ref_layer(x, adj, e_val, w0, w1, b, gamma, beta, mean, var, eps=1e-5):
    mask = adj > 0
    logits = jnp.where(mask, jnp.full_like(adj, e_val), jnp.full_like(adj, -9e15))
    a = jax.nn.softmax(logits, axis=1)
    eye = jnp.eye(adj.shape[0], dtype=a.dtype)
    h0 = x @ w0
    h1 = x @ w1
    y = (jnp.einsum("jk,bkc->bjc", a * eye, h0)
         + jnp.einsum("jk,bkc->bjc", a * (1.0 - eye), h1)
         + b[None, None, :])
    y = (y - mean) / jnp.sqrt(var + eps) * gamma + beta
    return jnp.maximum(y, 0.0)


def ref_res_graph_conv(x, adj, e_val, p1, p2):
    y1 = _ref_layer(x, adj, e_val, *p1)
    y2 = _ref_layer(y1, adj, e_val, *p2)
    return x + y2


# ----------------------------- main -----------------------------

if __name__ == "__main__":
    B, J = 32, 16         # batch, graph nodes (joints)
    Cin = Cout = 32       # input_dim == output_dim (residual)
    H = 64                # hid_dim
    TB_INNER = 8          # samples per row-group -> TB_INNER*J = 128 rows
    STEPS = 2             # grid steps (2 "parallel" programs for v7x's two TCs)
    E_VAL = 1.0           # SemGraphConv `e` init value

    key = jax.random.PRNGKey(0)
    keys = jax.random.split(key, 16)

    # input
    x = jax.random.normal(keys[0], (B, J, Cin), jnp.float32)

    # deterministic adjacency: chain graph + self loops
    adj_np = np.eye(J, dtype=np.float32)
    for i in range(J - 1):
        adj_np[i, i + 1] = 1.0
        adj_np[i + 1, i] = 1.0
    adj = jnp.asarray(adj_np)

    # SemGraphConv 1 params: W (2, Cin, H), bias (H,); BN1 eval-mode running stats
    w10 = xavier(keys[1], (Cin, H))
    w11 = xavier(keys[2], (Cin, H))
    b1 = jax.random.uniform(keys[3], (H,), jnp.float32,
                            -1.0 / np.sqrt(H), 1.0 / np.sqrt(H))
    g1 = 1.0 + 0.1 * jax.random.normal(keys[4], (H,), jnp.float32)
    be1 = 0.1 * jax.random.normal(keys[5], (H,), jnp.float32)
    m1 = 0.1 * jax.random.normal(keys[6], (H,), jnp.float32)
    v1 = 1.0 + 0.1 * jax.random.uniform(keys[7], (H,), jnp.float32)

    # SemGraphConv 2 params: W (2, H, Cout), bias (Cout,); BN2
    w20 = xavier(keys[8], (H, Cout))
    w21 = xavier(keys[9], (H, Cout))
    b2 = jax.random.uniform(keys[10], (Cout,), jnp.float32,
                            -1.0 / np.sqrt(Cout), 1.0 / np.sqrt(Cout))
    g2 = 1.0 + 0.1 * jax.random.normal(keys[11], (Cout,), jnp.float32)
    be2 = 0.1 * jax.random.normal(keys[12], (Cout,), jnp.float32)
    m2 = 0.1 * jax.random.normal(keys[13], (Cout,), jnp.float32)
    v2 = 1.0 + 0.1 * jax.random.uniform(keys[14], (Cout,), jnp.float32)

    # fold parameters once at setup time (outside the per-call path)
    d_big, a_big = fuse_adjacency(adj, E_VAL, tb_inner=TB_INNER)
    s1, t1 = fuse_layer(b1, g1, be1, m1, v1)
    s2, t2 = fuse_layer(b2, g2, be2, m2, v2)
    d_big, a_big, s1, t1, s2, t2 = jax.block_until_ready(
        (d_big, a_big, s1, t1, s2, t2))

    out = res_graph_conv(x, d_big, a_big,
                         w10, w11, s1, t1, w20, w21, s2, t2,
                         target_steps=STEPS)
    out = jax.block_until_ready(out)

    ref = ref_res_graph_conv(
        x, adj, E_VAL,
        (w10, w11, b1, g1, be1, m1, v1),
        (w20, w21, b2, g2, be2, m2, v2))

    np.testing.assert_allclose(np.asarray(out), np.asarray(ref), rtol=1e-4, atol=1e-4)

    print("KERNEL_OK")
</pallas_src>

<mosaic_0001>
module attributes {stable_mosaic.version = 11 : i64} {
  func.func @_res_graph_conv_kernel(%arg0: i32, %arg1: memref<16x16x32xf32, #tpu.memory_space<vmem>>, %arg2: memref<128x1xf32, #tpu.memory_space<vmem>>, %arg3: memref<128x128xf32, #tpu.memory_space<vmem>>, %arg4: memref<32x64xf32, #tpu.memory_space<vmem>>, %arg5: memref<32x64xf32, #tpu.memory_space<vmem>>, %arg6: memref<1x64xf32, #tpu.memory_space<vmem>>, %arg7: memref<1x64xf32, #tpu.memory_space<vmem>>, %arg8: memref<64x32xf32, #tpu.memory_space<vmem>>, %arg9: memref<64x32xf32, #tpu.memory_space<vmem>>, %arg10: memref<1x32xf32, #tpu.memory_space<vmem>>, %arg11: memref<1x32xf32, #tpu.memory_space<vmem>>, %arg12: memref<16x16x32xf32, #tpu.memory_space<vmem>>) attributes {dimension_semantics = [#tpu.dimension_semantics<parallel>], iteration_bounds = array<i64: 2>, scalar_prefetch = 0 : i64, scratch_operands = 0 : i64, tpu.core_type = #tpu.core_type<tc>, window_params = [{transform_indices = @transform_0, window_bounds = array<i64: 16, 16, 32>}, {pipeline_mode = #tpu.pipeline_mode<synchronous>, transform_indices = @transform_1, window_bounds = array<i64: 128, 1>}, {pipeline_mode = #tpu.pipeline_mode<synchronous>, transform_indices = @transform_2, window_bounds = array<i64: 128, 128>}, {pipeline_mode = #tpu.pipeline_mode<synchronous>, transform_indices = @transform_3, window_bounds = array<i64: 32, 64>}, {pipeline_mode = #tpu.pipeline_mode<synchronous>, transform_indices = @transform_4, window_bounds = array<i64: 32, 64>}, {pipeline_mode = #tpu.pipeline_mode<synchronous>, transform_indices = @transform_5, window_bounds = array<i64: 1, 64>}, {pipeline_mode = #tpu.pipeline_mode<synchronous>, transform_indices = @transform_6, window_bounds = array<i64: 1, 64>}, {pipeline_mode = #tpu.pipeline_mode<synchronous>, transform_indices = @transform_7, window_bounds = array<i64: 64, 32>}, {pipeline_mode = #tpu.pipeline_mode<synchronous>, transform_indices = @transform_8, window_bounds = array<i64: 64, 32>}, {pipeline_mode = #tpu.pipeline_mode<synchronous>, transform_indices = @transform_9, window_bounds = array<i64: 1, 32>}, {pipeline_mode = #tpu.pipeline_mode<synchronous>, transform_indices = @transform_10, window_bounds = array<i64: 1, 32>}, {transform_indices = @transform_11, window_bounds = array<i64: 16, 16, 32>}]} {
    %c0 = arith.constant 0 : index
    %c0_0 = arith.constant 0 : index
    %0 = vector.load %arg2[%c0, %c0_0] : memref<128x1xf32, #tpu.memory_space<vmem>>, vector<128x1xf32>
    %c0_1 = arith.constant 0 : index
    %c0_2 = arith.constant 0 : index
    %1 = vector.load %arg3[%c0_1, %c0_2] : memref<128x128xf32, #tpu.memory_space<vmem>>, vector<128x128xf32>
    %c0_3 = arith.constant 0 : index
    %c0_4 = arith.constant 0 : index
    %2 = vector.load %arg4[%c0_3, %c0_4] : memref<32x64xf32, #tpu.memory_space<vmem>>, vector<32x64xf32>
    %c0_5 = arith.constant 0 : index
    %c0_6 = arith.constant 0 : index
    %3 = vector.load %arg5[%c0_5, %c0_6] : memref<32x64xf32, #tpu.memory_space<vmem>>, vector<32x64xf32>
    %c0_7 = arith.constant 0 : index
    %c0_8 = arith.constant 0 : index
    %4 = vector.load %arg6[%c0_7, %c0_8] : memref<1x64xf32, #tpu.memory_space<vmem>>, vector<1x64xf32>
    %c0_9 = arith.constant 0 : index
    %c0_10 = arith.constant 0 : index
    %5 = vector.load %arg7[%c0_9, %c0_10] : memref<1x64xf32, #tpu.memory_space<vmem>>, vector<1x64xf32>
    %c0_11 = arith.constant 0 : index
    %c0_12 = arith.constant 0 : index
    %6 = vector.load %arg8[%c0_11, %c0_12] : memref<64x32xf32, #tpu.memory_space<vmem>>, vector<64x32xf32>
    %c0_13 = arith.constant 0 : index
    %c0_14 = arith.constant 0 : index
    %7 = vector.load %arg9[%c0_13, %c0_14] : memref<64x32xf32, #tpu.memory_space<vmem>>, vector<64x32xf32>
    %c0_15 = arith.constant 0 : index
    %c0_16 = arith.constant 0 : index
    %8 = vector.load %arg10[%c0_15, %c0_16] : memref<1x32xf32, #tpu.memory_space<vmem>>, vector<1x32xf32>
    %c0_17 = arith.constant 0 : index
    %c0_18 = arith.constant 0 : index
    %9 = vector.load %arg11[%c0_17, %c0_18] : memref<1x32xf32, #tpu.memory_space<vmem>>, vector<1x32xf32>
    %c0_i32 = arith.constant 0 : i32
    %c8_i32 = arith.constant 8 : i32
    %10 = arith.muli %c0_i32, %c8_i32 : i32
    %11 = tpu.assume_multiple %10, 8 : i32
    %12 = arith.index_cast %11 : i32 to index
    %c0_19 = arith.constant 0 : index
    %c0_20 = arith.constant 0 : index
    %13 = vector.load %arg1[%12, %c0_19, %c0_20] : memref<16x16x32xf32, #tpu.memory_space<vmem>>, vector<8x16x32xf32>
    %14 = vector.shape_cast %13 : vector<8x16x32xf32> to vector<128x32xf32>
    %cst = arith.constant dense<0.000000e+00> : vector<128x32xf32>
    %15 = tpu.matmul %1, %14, %cst {dimension_numbers = #tpu.dot_dimension_numbers<[1], [0], [0], [1], [0, 0, 1, 1], [], []>} : vector<128x128xf32>, vector<128x32xf32>, vector<128x32xf32> -> vector<128x32xf32>
    %16 = vector.broadcast %0 : vector<128x1xf32> to vector<128x32xf32>
    %17 = arith.mulf %16, %14 : vector<128x32xf32>
    %cst_21 = arith.constant dense<0.000000e+00> : vector<128x64xf32>
    %18 = tpu.matmul %17, %2, %cst_21 {dimension_numbers = #tpu.dot_dimension_numbers<[1], [0], [0], [1], [0, 0, 1, 1], [], []>} : vector<128x32xf32>, vector<32x64xf32>, vector<128x64xf32> -> vector<128x64xf32>
    %cst_22 = arith.constant dense<0.000000e+00> : vector<128x64xf32>
    %19 = tpu.matmul %15, %3, %cst_22 {dimension_numbers = #tpu.dot_dimension_numbers<[1], [0], [0], [1], [0, 0, 1, 1], [], []>} : vector<128x32xf32>, vector<32x64xf32>, vector<128x64xf32> -> vector<128x64xf32>
    %20 = arith.addf %18, %19 : vector<128x64xf32>
    %21 = vector.broadcast %4 : vector<1x64xf32> to vector<128x64xf32>
    %22 = arith.mulf %20, %21 : vector<128x64xf32>
    %23 = vector.broadcast %5 : vector<1x64xf32> to vector<128x64xf32>
    %24 = arith.addf %22, %23 : vector<128x64xf32>
    %cst_23 = arith.constant 0.000000e+00 : f32
    %25 = vector.broadcast %cst_23 : f32 to vector<128x64xf32>
    %26 = arith.maximumf %24, %25 : vector<128x64xf32>
    %cst_24 = arith.constant dense<0.000000e+00> : vector<128x32xf32>
    %27 = tpu.matmul %26, %6, %cst_24 {dimension_numbers = #tpu.dot_dimension_numbers<[1], [0], [0], [1], [0, 0, 1, 1], [], []>} : vector<128x64xf32>, vector<64x32xf32>, vector<128x32xf32> -> vector<128x32xf32>
    %cst_25 = arith.constant dense<0.000000e+00> : vector<128x32xf32>
    %28 = tpu.matmul %26, %7, %cst_25 {dimension_numbers = #tpu.dot_dimension_numbers<[1], [0], [0], [1], [0, 0, 1, 1], [], []>} : vector<128x64xf32>, vector<64x32xf32>, vector<128x32xf32> -> vector<128x32xf32>
    %29 = vector.broadcast %0 : vector<128x1xf32> to vector<128x32xf32>
    %30 = arith.mulf %29, %27 : vector<128x32xf32>
    %cst_26 = arith.constant dense<0.000000e+00> : vector<128x32xf32>
    %31 = tpu.matmul %1, %28, %cst_26 {dimension_numbers = #tpu.dot_dimension_numbers<[1], [0], [0], [1], [0, 0, 1, 1], [], []>} : vector<128x128xf32>, vector<128x32xf32>, vector<128x32xf32> -> vector<128x32xf32>
    %32 = arith.addf %30, %31 : vector<128x32xf32>
    %33 = vector.broadcast %8 : vector<1x32xf32> to vector<128x32xf32>
    %34 = arith.mulf %32, %33 : vector<128x32xf32>
    %35 = vector.broadcast %9 : vector<1x32xf32> to vector<128x32xf32>
    %36 = arith.addf %34, %35 : vector<128x32xf32>
    %cst_27 = arith.constant 0.000000e+00 : f32
    %37 = vector.broadcast %cst_27 : f32 to vector<128x32xf32>
    %38 = arith.maximumf %36, %37 : vector<128x32xf32>
    %39 = arith.addf %14, %38 : vector<128x32xf32>
    %40 = vector.shape_cast %39 : vector<128x32xf32> to vector<8x16x32xf32>
    %41 = arith.index_cast %11 : i32 to index
    %c0_28 = arith.constant 0 : index
    %c0_29 = arith.constant 0 : index
    %42 = vector.load %arg12[%41, %c0_28, %c0_29] : memref<16x16x32xf32, #tpu.memory_space<vmem>>, vector<8x16x32xf32>
    tpu.vector_store %arg12[%41, %c0_28, %c0_29], %40 {strides = array<i32>} : memref<16x16x32xf32, #tpu.memory_space<vmem>>, vector<8x16x32xf32>,
    %c1_i32 = arith.constant 1 : i32
    %c8_i32_30 = arith.constant 8 : i32
    %43 = arith.muli %c1_i32, %c8_i32_30 : i32
    %44 = tpu.assume_multiple %43, 8 : i32
    %45 = arith.index_cast %44 : i32 to index
    %c0_31 = arith.constant 0 : index
    %c0_32 = arith.constant 0 : index
    %46 = vector.load %arg1[%45, %c0_31, %c0_32] : memref<16x16x32xf32, #tpu.memory_space<vmem>>, vector<8x16x32xf32>
    %47 = vector.shape_cast %46 : vector<8x16x32xf32> to vector<128x32xf32>
    %cst_33 = arith.constant dense<0.000000e+00> : vector<128x32xf32>
    %48 = tpu.matmul %1, %47, %cst_33 {dimension_numbers = #tpu.dot_dimension_numbers<[1], [0], [0], [1], [0, 0, 1, 1], [], []>} : vector<128x128xf32>, vector<128x32xf32>, vector<128x32xf32> -> vector<128x32xf32>
    %49 = vector.broadcast %0 : vector<128x1xf32> to vector<128x32xf32>
    %50 = arith.mulf %49, %47 : vector<128x32xf32>
    %cst_34 = arith.constant dense<0.000000e+00> : vector<128x64xf32>
    %51 = tpu.matmul %50, %2, %cst_34 {dimension_numbers = #tpu.dot_dimension_numbers<[1], [0], [0], [1], [0, 0, 1, 1], [], []>} : vector<128x32xf32>, vector<32x64xf32>, vector<128x64xf32> -> vector<128x64xf32>
    %cst_35 = arith.constant dense<0.000000e+00> : vector<128x64xf32>
    %52 = tpu.matmul %48, %3, %cst_35 {dimension_numbers = #tpu.dot_dimension_numbers<[1], [0], [0], [1], [0, 0, 1, 1], [], []>} : vector<128x32xf32>, vector<32x64xf32>, vector<128x64xf32> -> vector<128x64xf32>
    %53 = arith.addf %51, %52 : vector<128x64xf32>
    %54 = vector.broadcast %4 : vector<1x64xf32> to vector<128x64xf32>
    %55 = arith.mulf %53, %54 : vector<128x64xf32>
    %56 = vector.broadcast %5 : vector<1x64xf32> to vector<128x64xf32>
    %57 = arith.addf %55, %56 : vector<128x64xf32>
    %cst_36 = arith.constant 0.000000e+00 : f32
    %58 = vector.broadcast %cst_36 : f32 to vector<128x64xf32>
    %59 = arith.maximumf %57, %58 : vector<128x64xf32>
    %cst_37 = arith.constant dense<0.000000e+00> : vector<128x32xf32>
    %60 = tpu.matmul %59, %6, %cst_37 {dimension_numbers = #tpu.dot_dimension_numbers<[1], [0], [0], [1], [0, 0, 1, 1], [], []>} : vector<128x64xf32>, vector<64x32xf32>, vector<128x32xf32> -> vector<128x32xf32>
    %cst_38 = arith.constant dense<0.000000e+00> : vector<128x32xf32>
    %61 = tpu.matmul %59, %7, %cst_38 {dimension_numbers = #tpu.dot_dimension_numbers<[1], [0], [0], [1], [0, 0, 1, 1], [], []>} : vector<128x64xf32>, vector<64x32xf32>, vector<128x32xf32> -> vector<128x32xf32>
    %62 = vector.broadcast %0 : vector<128x1xf32> to vector<128x32xf32>
    %63 = arith.mulf %62, %60 : vector<128x32xf32>
    %cst_39 = arith.constant dense<0.000000e+00> : vector<128x32xf32>
    %64 = tpu.matmul %1, %61, %cst_39 {dimension_numbers = #tpu.dot_dimension_numbers<[1], [0], [0], [1], [0, 0, 1, 1], [], []>} : vector<128x128xf32>, vector<128x32xf32>, vector<128x32xf32> -> vector<128x32xf32>
    %65 = arith.addf %63, %64 : vector<128x32xf32>
    %66 = vector.broadcast %8 : vector<1x32xf32> to vector<128x32xf32>
    %67 = arith.mulf %65, %66 : vector<128x32xf32>
    %68 = vector.broadcast %9 : vector<1x32xf32> to vector<128x32xf32>
    %69 = arith.addf %67, %68 : vector<128x32xf32>
    %cst_40 = arith.constant 0.000000e+00 : f32
    %70 = vector.broadcast %cst_40 : f32 to vector<128x32xf32>
    %71 = arith.maximumf %69, %70 : vector<128x32xf32>
    %72 = arith.addf %47, %71 : vector<128x32xf32>
    %73 = vector.shape_cast %72 : vector<128x32xf32> to vector<8x16x32xf32>
    %74 = arith.index_cast %44 : i32 to index
    %c0_41 = arith.constant 0 : index
    %c0_42 = arith.constant 0 : index
    %75 = vector.load %arg12[%74, %c0_41, %c0_42] : memref<16x16x32xf32, #tpu.memory_space<vmem>>, vector<8x16x32xf32>
    tpu.vector_store %arg12[%74, %c0_41, %c0_42], %73 {strides = array<i32>} : memref<16x16x32xf32, #tpu.memory_space<vmem>>, vector<8x16x32xf32>,
    %c2_i32 = arith.constant 2 : i32
    return
  }
  func.func @transform_0(%arg0: i32) -> (i32, i32, i32) {
    %c0_i32 = arith.constant 0 : i32
    %c0_i32_0 = arith.constant 0 : i32
    %c0_i32_1 = arith.constant 0 : i32
    return %arg0, %c0_i32, %c0_i32_0 : i32, i32, i32
  }
  func.func @transform_1(%arg0: i32) -> (i32, i32) {
    %c0_i32 = arith.constant 0 : i32
    %c0_i32_0 = arith.constant 0 : i32
    %c0_i32_1 = arith.constant 0 : i32
    return %c0_i32, %c0_i32_0 : i32, i32
  }
  func.func @transform_2(%arg0: i32) -> (i32, i32) {
    %c0_i32 = arith.constant 0 : i32
    %c0_i32_0 = arith.constant 0 : i32
    %c0_i32_1 = arith.constant 0 : i32
    return %c0_i32, %c0_i32_0 : i32, i32
  }
  func.func @transform_3(%arg0: i32) -> (i32, i32) {
    %c0_i32 = arith.constant 0 : i32
    %c0_i32_0 = arith.constant 0 : i32
    %c0_i32_1 = arith.constant 0 : i32
    return %c0_i32, %c0_i32_0 : i32, i32
  }
  func.func @transform_4(%arg0: i32) -> (i32, i32) {
    %c0_i32 = arith.constant 0 : i32
    %c0_i32_0 = arith.constant 0 : i32
    %c0_i32_1 = arith.constant 0 : i32
    return %c0_i32, %c0_i32_0 : i32, i32
  }
  func.func @transform_5(%arg0: i32) -> (i32, i32) {
    %c0_i32 = arith.constant 0 : i32
    %c0_i32_0 = arith.constant 0 : i32
    %c0_i32_1 = arith.constant 0 : i32
    return %c0_i32, %c0_i32_0 : i32, i32
  }
  func.func @transform_6(%arg0: i32) -> (i32, i32) {
    %c0_i32 = arith.constant 0 : i32
    %c0_i32_0 = arith.constant 0 : i32
    %c0_i32_1 = arith.constant 0 : i32
    return %c0_i32, %c0_i32_0 : i32, i32
  }
  func.func @transform_7(%arg0: i32) -> (i32, i32) {
    %c0_i32 = arith.constant 0 : i32
    %c0_i32_0 = arith.constant 0 : i32
    %c0_i32_1 = arith.constant 0 : i32
    return %c0_i32, %c0_i32_0 : i32, i32
  }
  func.func @transform_8(%arg0: i32) -> (i32, i32) {
    %c0_i32 = arith.constant 0 : i32
    %c0_i32_0 = arith.constant 0 : i32
    %c0_i32_1 = arith.constant 0 : i32
    return %c0_i32, %c0_i32_0 : i32, i32
  }
  func.func @transform_9(%arg0: i32) -> (i32, i32) {
    %c0_i32 = arith.constant 0 : i32
    %c0_i32_0 = arith.constant 0 : i32
    %c0_i32_1 = arith.constant 0 : i32
    return %c0_i32, %c0_i32_0 : i32, i32
  }
  func.func @transform_10(%arg0: i32) -> (i32, i32) {
    %c0_i32 = arith.constant 0 : i32
    %c0_i32_0 = arith.constant 0 : i32
    %c0_i32_1 = arith.constant 0 : i32
    return %c0_i32, %c0_i32_0 : i32, i32
  }
  func.func @transform_11(%arg0: i32) -> (i32, i32, i32) {
    %c0_i32 = arith.constant 0 : i32
    %c0_i32_0 = arith.constant 0 : i32
    %c0_i32_1 = arith.constant 0 : i32
    return %arg0, %c0_i32, %c0_i32_0 : i32, i32, i32
  }
}

</mosaic_0001>

<llo_original>
// kernel: tpu_custom_call.1
$region0: #{tpu_custom_call.1}
  #allocation0 [shape = 'u32[]', space=smem, size = 0x4, offset = 0x4, fixed_abs, tag = 'smem constant byte address 0x4 - core index']
  #allocation1 [shape = 'u32[144,128]{1,0:T(1,128)}', space=vmem, size = 0x12000, scoped, tag = 'internal scratch']
  %s0 = inlined_call_operand.hbm [shape: f32[32,16,32], index: 0, kind: input, shape index: {}]
  %s1 = inlined_call_operand.vmem [shape: f32[128,1], index: 1, kind: input, shape index: {}]
  %s2 = inlined_call_operand.vmem [shape: f32[128,128], index: 2, kind: input, shape index: {}]
  %s3 = inlined_call_operand.vmem [shape: f32[32,64], index: 3, kind: input, shape index: {}]
  %s4 = inlined_call_operand.vmem [shape: f32[32,64], index: 4, kind: input, shape index: {}]
  %s5 = inlined_call_operand.vmem [shape: f32[1,64], index: 5, kind: input, shape index: {}]
  %s6 = inlined_call_operand.vmem [shape: f32[1,64], index: 6, kind: input, shape index: {}]
  %s7 = inlined_call_operand.vmem [shape: f32[64,32], index: 7, kind: input, shape index: {}]
  %s8 = inlined_call_operand.vmem [shape: f32[64,32], index: 8, kind: input, shape index: {}]
  %s9 = inlined_call_operand.vmem [shape: f32[1,32], index: 9, kind: input, shape index: {}]
  %s10 = inlined_call_operand.vmem [shape: f32[1,32], index: 10, kind: input, shape index: {}]
  %s11 = inlined_call_operand.hbm [shape: f32[32,16,32], index: 11, kind: output, shape index: {}]
  %s12 = sld [smem:[#allocation0]]
  $region81: #{tpu_custom_call.1} parent=0
    _
  %s14 = ssub.s32 1, %s12
  %s15 = scalar_select 0, %s14, %s12
  $region1: #{tpu_custom_call.1} parent=0
    #allocation2 [shape = 'u8[262144]{0}', space=vmem, size = 0x40000, scoped, tag = 'input window, operand 0']
    #allocation3 [shape = 's32[2]{0}', space=sflag, size = 0x8, scoped, tag = 'scoped memory for tpu_custom_call.1']
    #allocation4 [shape = 's32[2]{0}', space=sflag, size = 0x8, scoped, tag = 'scoped memory for tpu_custom_call.1']
    #allocation5 [shape = 'u8[262144]{0}', space=vmem, size = 0x40000, scoped, tag = 'output window, operand 0']
    %16 = vsyncpa [#allocation3], 0
    %s17 = scalar_lea.sflag [#allocation3], 1
    %18 = vsyncpa %s17, 0
    %19 = vsyncpa [#allocation4], 0
    %s20 = scalar_lea.sflag [#allocation4], 1
    %21 = vsyncpa %s20, 0
    loop: start=0, step=1, limit=4
    $region2: #{tpu_custom_call.1} parent=1 // loop_pre_header
      _
    $region3: #{tpu_custom_call.1} parent=1 // loop_header
      %s23 = sphi 0, %s27
      %p24 = scmp.ge.s32.totalorder %s23, 4
      %s33 = sphi 0, %s35
      %s36 = sphi 0, %s33
      %s37 = sphi 0, %s36
      %s53 = sphi 0, %s37
      %s57 = sphi 0, %s57
      %s59 = sphi 0, %s57
      %s60 = sphi 0, %s59
      %s74 = sphi 0, %s60
      %s78 = sphi 0, %s78
      %s80 = sphi 0, %s78
      %s81 = sphi 0, %s80
      %s95 = sphi 0, %s81
      %s99 = sphi 0, %s99
      %s101 = sphi 0, %s99
      %s102 = sphi 0, %s101
      %s116 = sphi 0, %s102
      %s120 = sphi 0, %s120
      %s122 = sphi 0, %s120
      %s123 = sphi 0, %s122
      %s137 = sphi 0, %s123
      %s141 = sphi 0, %s141
      %s143 = sphi 0, %s141
      %s144 = sphi 0, %s143
      %s158 = sphi 0, %s144
      %s162 = sphi 0, %s162
      %s164 = sphi 0, %s162
      %s165 = sphi 0, %s164
      %s179 = sphi 0, %s165
      %s183 = sphi 0, %s183
      %s185 = sphi 0, %s183
      %s186 = sphi 0, %s185
      %s200 = sphi 0, %s186
      %s204 = sphi 0, %s204
      %s206 = sphi 0, %s204
      %s207 = sphi 0, %s206
      %s221 = sphi 0, %s207
      %s225 = sphi 0, %s225
      %s227 = sphi 0, %s225
      %s228 = sphi 0, %s227
      %s242 = sphi 0, %s228
      %s246 = sphi 0, %s246
      %s248 = sphi 0, %s246
      %s249 = sphi 0, %s248
      %s263 = sphi 0, %s249
      %s269 = sphi 0, %s271
      %s272 = sphi 0, %s269
      %s273 = sphi 0, %s272
      %s289 = sphi 0, %s273
    $region4: #{tpu_custom_call.1} parent=1 // loop_header_branch
      %26 = sbr.rel (%p24) target = $region8
    $region5: #{tpu_custom_call.1} parent=1 // loop_body
      %s28 = ssub.s32 %s23, 1
      %s29 = ssub.s32 %s23, 2
      %s30 = sadd.s32 %s23, 1
      %s31 = ssub.s32 %s23, %s30
      %p32 = scmp.eq.s32.totalorder %s31, 0
      %s34 = sadd.s32 %s33, 1
      %s35 = scalar_select %p32, %s33, %s34
      %p38 = pneg %p32
      %p39 = scmp.eq.s32.totalorder %s23, 1
      %p40 = por %p38, %p39
      %p41 = scmp.ne.s32.totalorder %s33, %s36
      %p42 = scmp.eq.s32.totalorder %s23, 0
      %p43 = por %p41, %p42
      %p44 = scmp.ne.s32.totalorder %s33, %s36
      %p45 = scmp.eq.s32.totalorder %s28, 1
      %p46 = por %p44, %p45
      %p47 = scmp.ne.s32.totalorder %s36, %s37
      %p48 = scmp.eq.s32.totalorder %s28, 0
      %p49 = por %p47, %p48
      %p50 = scmp.ne.s32.totalorder %s36, %s37
      %p51 = scmp.eq.s32.totalorder %s29, 1
      %p52 = por %p50, %p51
      %p54 = scmp.ne.s32.totalorder %s37, %s53
      %p55 = scmp.eq.s32.totalorder %s29, 0
      %p56 = por %p54, %p55
      %s58 = sadd.s32 %s57, 1
      %p61 = scmp.eq.s32.totalorder %s23, 1
      %p62 = scmp.ne.s32.totalorder %s57, %s59
      %p63 = scmp.eq.s32.totalorder %s23, 0
      %p64 = por %p62, %p63
      %p65 = scmp.ne.s32.totalorder %s57, %s59
      %p66 = scmp.eq.s32.totalorder %s28, 1
      %p67 = por %p65, %p66
      %p68 = scmp.ne.s32.totalorder %s59, %s60
      %p69 = scmp.eq.s32.totalorder %s28, 0
      %p70 = por %p68, %p69
      %p71 = scmp.ne.s32.totalorder %s59, %s60
      %p72 = scmp.eq.s32.totalorder %s29, 1
      %p73 = por %p71, %p72
      %p75 = scmp.ne.s32.totalorder %s60, %s74
      %p76 = scmp.eq.s32.totalorder %s29, 0
      %p77 = por %p75, %p76
      %s79 = sadd.s32 %s78, 1
      %p82 = scmp.eq.s32.totalorder %s23, 1
      %p83 = scmp.ne.s32.totalorder %s78, %s80
      %p84 = scmp.eq.s32.totalorder %s23, 0
      %p85 = por %p83, %p84
      %p86 = scmp.ne.s32.totalorder %s78, %s80
      %p87 = scmp.eq.s32.totalorder %s28, 1
      %p88 = por %p86, %p87
      %p89 = scmp.ne.s32.totalorder %s80, %s81
      %p90 = scmp.eq.s32.totalorder %s28, 0
      %p91 = por %p89, %p90
      %p92 = scmp.ne.s32.totalorder %s80, %s81
      %p93 = scmp.eq.s32.totalorder %s29, 1
      %p94 = por %p92, %p93
      %p96 = scmp.ne.s32.totalorder %s81, %s95
      %p97 = scmp.eq.s32.totalorder %s29, 0
      %p98 = por %p96, %p97
      %s100 = sadd.s32 %s99, 1
      %p103 = scmp.eq.s32.totalorder %s23, 1
      %p104 = scmp.ne.s32.totalorder %s99, %s101
      %p105 = scmp.eq.s32.totalorder %s23, 0
      %p106 = por %p104, %p105
      %p107 = scmp.ne.s32.totalorder %s99, %s101
      %p108 = scmp.eq.s32.totalorder %s28, 1
      %p109 = por %p107, %p108
      %p110 = scmp.ne.s32.totalorder %s101, %s102
      %p111 = scmp.eq.s32.totalorder %s28, 0
      %p112 = por %p110, %p111
      %p113 = scmp.ne.s32.totalorder %s101, %s102
      %p114 = scmp.eq.s32.totalorder %s29, 1
      %p115 = por %p113, %p114
      %p117 = scmp.ne.s32.totalorder %s102, %s116
      %p118 = scmp.eq.s32.totalorder %s29, 0
      %p119 = por %p117, %p118
      %s121 = sadd.s32 %s120, 1
      %p124 = scmp.eq.s32.totalorder %s23, 1
      %p125 = scmp.ne.s32.totalorder %s120, %s122
      %p126 = scmp.eq.s32.totalorder %s23, 0
      %p127 = por %p125, %p126
      %p128 = scmp.ne.s32.totalorder %s120, %s122
      %p129 = scmp.eq.s32.totalorder %s28, 1
      %p130 = por %p128, %p129
      %p131 = scmp.ne.s32.totalorder %s122, %s123
      %p132 = scmp.eq.s32.totalorder %s28, 0
      %p133 = por %p131, %p132
      %p134 = scmp.ne.s32.totalorder %s122, %s123
      %p135 = scmp.eq.s32.totalorder %s29, 1
      %p136 = por %p134, %p135
      %p138 = scmp.ne.s32.totalorder %s123, %s137
      %p139 = scmp.eq.s32.totalorder %s29, 0
      %p140 = por %p138, %p139
      %s142 = sadd.s32 %s141, 1
      %p145 = scmp.eq.s32.totalorder %s23, 1
      %p146 = scmp.ne.s32.totalorder %s141, %s143
      %p147 = scmp.eq.s32.totalorder %s23, 0
      %p148 = por %p146, %p147
      %p149 = scmp.ne.s32.totalorder %s141, %s143
      %p150 = scmp.eq.s32.totalorder %s28, 1
      %p151 = por %p149, %p150
      %p152 = scmp.ne.s32.totalorder %s143, %s144
      %p153 = scmp.eq.s32.totalorder %s28, 0
      %p154 = por %p152, %p153
      %p155 = scmp.ne.s32.totalorder %s143, %s144
      %p156 = scmp.eq.s32.totalorder %s29, 1
      %p157 = por %p155, %p156
      %p159 = scmp.ne.s32.totalorder %s144, %s158
      %p160 = scmp.eq.s32.totalorder %s29, 0
      %p161 = por %p159, %p160
      %s163 = sadd.s32 %s162, 1
      %p166 = scmp.eq.s32.totalorder %s23, 1
      %p167 = scmp.ne.s32.totalorder %s162, %s164
      %p168 = scmp.eq.s32.totalorder %s23, 0
      %p169 = por %p167, %p168
      %p170 = scmp.ne.s32.totalorder %s162, %s164
      %p171 = scmp.eq.s32.totalorder %s28, 1
      %p172 = por %p170, %p171
      %p173 = scmp.ne.s32.totalorder %s164, %s165
      %p174 = scmp.eq.s32.totalorder %s28, 0
      %p175 = por %p173, %p174
      %p176 = scmp.ne.s32.totalorder %s164, %s165
      %p177 = scmp.eq.s32.totalorder %s29, 1
      %p178 = por %p176, %p177
      %p180 = scmp.ne.s32.totalorder %s165, %s179
      %p181 = scmp.eq.s32.totalorder %s29, 0
      %p182 = por %p180, %p181
      %s184 = sadd.s32 %s183, 1
      %p187 = scmp.eq.s32.totalorder %s23, 1
      %p188 = scmp.ne.s32.totalorder %s183, %s185
      %p189 = scmp.eq.s32.totalorder %s23, 0
      %p190 = por %p188, %p189
      %p191 = scmp.ne.s32.totalorder %s183, %s185
      %p192 = scmp.eq.s32.totalorder %s28, 1
      %p193 = por %p191, %p192
      %p194 = scmp.ne.s32.totalorder %s185, %s186
      %p195 = scmp.eq.s32.totalorder %s28, 0
      %p196 = por %p194, %p195
      %p197 = scmp.ne.s32.totalorder %s185, %s186
      %p198 = scmp.eq.s32.totalorder %s29, 1
      %p199 = por %p197, %p198
      %p201 = scmp.ne.s32.totalorder %s186, %s200
      %p202 = scmp.eq.s32.totalorder %s29, 0
      %p203 = por %p201, %p202
      %s205 = sadd.s32 %s204, 1
      %p208 = scmp.eq.s32.totalorder %s23, 1
      %p209 = scmp.ne.s32.totalorder %s204, %s206
      %p210 = scmp.eq.s32.totalorder %s23, 0
      %p211 = por %p209, %p210
      %p212 = scmp.ne.s32.totalorder %s204, %s206
      %p213 = scmp.eq.s32.totalorder %s28, 1
      %p214 = por %p212, %p213
      %p215 = scmp.ne.s32.totalorder %s206, %s207
      %p216 = scmp.eq.s32.totalorder %s28, 0
      %p217 = por %p215, %p216
      %p218 = scmp.ne.s32.totalorder %s206, %s207
      %p219 = scmp.eq.s32.totalorder %s29, 1
      %p220 = por %p218, %p219
      %p222 = scmp.ne.s32.totalorder %s207, %s221
      %p223 = scmp.eq.s32.totalorder %s29, 0
      %p224 = por %p222, %p223
      %s226 = sadd.s32 %s225, 1
      %p229 = scmp.eq.s32.totalorder %s23, 1
      %p230 = scmp.ne.s32.totalorder %s225, %s227
      %p231 = scmp.eq.s32.totalorder %s23, 0
      %p232 = por %p230, %p231
      %p233 = scmp.ne.s32.totalorder %s225, %s227
      %p234 = scmp.eq.s32.totalorder %s28, 1
      %p235 = por %p233, %p234
      %p236 = scmp.ne.s32.totalorder %s227, %s228
      %p237 = scmp.eq.s32.totalorder %s28, 0
      %p238 = por %p236, %p237
      %p239 = scmp.ne.s32.totalorder %s227, %s228
      %p240 = scmp.eq.s32.totalorder %s29, 1
      %p241 = por %p239, %p240
      %p243 = scmp.ne.s32.totalorder %s228, %s242
      %p244 = scmp.eq.s32.totalorder %s29, 0
      %p245 = por %p243, %p244
      %s247 = sadd.s32 %s246, 1
      %p250 = scmp.eq.s32.totalorder %s23, 1
      %p251 = scmp.ne.s32.totalorder %s246, %s248
      %p252 = scmp.eq.s32.totalorder %s23, 0
      %p253 = por %p251, %p252
      %p254 = scmp.ne.s32.totalorder %s246, %s248
      %p255 = scmp.eq.s32.totalorder %s28, 1
      %p256 = por %p254, %p255
      %p257 = scmp.ne.s32.totalorder %s248, %s249
      %p258 = scmp.eq.s32.totalorder %s28, 0
      %p259 = por %p257, %p258
      %p260 = scmp.ne.s32.totalorder %s248, %s249
      %p261 = scmp.eq.s32.totalorder %s29, 1
      %p262 = por %p260, %p261
      %p264 = scmp.ne.s32.totalorder %s249, %s263
      %p265 = scmp.eq.s32.totalorder %s29, 0
      %p266 = por %p264, %p265
      %s267 = ssub.s32 %s23, %s30
      %p268 = scmp.eq.s32.totalorder %s267, 0
      %s270 = sadd.s32 %s269, 1
      %s271 = scalar_select %p268, %s269, %s270
      %p274 = pneg %p268
      %p275 = scmp.eq.s32.totalorder %s23, 1
      %p276 = por %p274, %p275
      %p277 = scmp.ne.s32.totalorder %s269, %s272
      %p278 = scmp.eq.s32.totalorder %s23, 0
      %p279 = por %p277, %p278
      %p280 = scmp.ne.s32.totalorder %s269, %s272
      %p281 = scmp.eq.s32.totalorder %s28, 1
      %p282 = por %p280, %p281
      %p283 = scmp.ne.s32.totalorder %s272, %s273
      %p284 = scmp.eq.s32.totalorder %s28, 0
      %p285 = por %p283, %p284
      %p286 = scmp.ne.s32.totalorder %s272, %s273
      %p287 = scmp.eq.s32.totalorder %s29, 1
      %p288 = por %p286, %p287
      %p290 = scmp.ne.s32.totalorder %s273, %s289
      %p291 = scmp.eq.s32.totalorder %s29, 0
      %p292 = por %p290, %p291
      %p293 = scmp.le.s32.totalorder 1, %s23
      %p294 = scmp.lt.s32.totalorder %s23, 3
      %p295 = pnand %p293, %p294
      %p296 = pneg %p295
      // Predicated region
      $region9: #{tpu_custom_call.1} parent=5 // pred_check
        _
      $region10: #{tpu_custom_call.1} parent=5 // pred_check_branch
        %298 = sbr.rel (%p295) target = $region12
      $region11: #{tpu_custom_call.1} parent=5 // pred_region
        %s299 = ssub.s32 %s23, 1
        // Predicated region
        $region13: #{tpu_custom_call.1} parent=11 // pred_check
          %p300 = pneg %p70
        $region14: #{tpu_custom_call.1} parent=11 // pred_check_branch
          %302 = sbr.rel (%p300) target = $region16
        $region15: #{tpu_custom_call.1} parent=11 // pred_region
          _
        $region16: #{tpu_custom_call.1} parent=11 // pred_fallthru
          _
        // Predicated region
        $region17: #{tpu_custom_call.1} parent=11 // pred_check
          %p303 = pneg %p91
        $region18: #{tpu_custom_call.1} parent=11 // pred_check_branch
          %305 = sbr.rel (%p303) target = $region20
        $region19: #{tpu_custom_call.1} parent=11 // pred_region
          _
        $region20: #{tpu_custom_call.1} parent=11 // pred_fallthru
          _
        // Predicated region
        $region21: #{tpu_custom_call.1} parent=11 // pred_check
          %p306 = pneg %p112
        $region22: #{tpu_custom_call.1} parent=11 // pred_check_branch
          %308 = sbr.rel (%p306) target = $region24
        $region23: #{tpu_custom_call.1} parent=11 // pred_region
          _
        $region24: #{tpu_custom_call.1} parent=11 // pred_fallthru
          _
        // Predicated region
        $region25: #{tpu_custom_call.1} parent=11 // pred_check
          %p309 = pneg %p133
        $region26: #{tpu_custom_call.1} parent=11 // pred_check_branch
          %311 = sbr.rel (%p309) target = $region28
        $region27: #{tpu_custom_call.1} parent=11 // pred_region
          _
        $region28: #{tpu_custom_call.1} parent=11 // pred_fallthru
          _
        // Predicated region
        $region29: #{tpu_custom_call.1} parent=11 // pred_check
          %p312 = pneg %p154
        $region30: #{tpu_custom_call.1} parent=11 // pred_check_branch
          %314 = sbr.rel (%p312) target = $region32
        $region31: #{tpu_custom_call.1} parent=11 // pred_region
          _
        $region32: #{tpu_custom_call.1} parent=11 // pred_fallthru
          _
        // Predicated region
        $region33: #{tpu_custom_call.1} parent=11 // pred_check
          %p315 = pneg %p175
        $region34: #{tpu_custom_call.1} parent=11 // pred_check_branch
          %317 = sbr.rel (%p315) target = $region36
        $region35: #{tpu_custom_call.1} parent=11 // pred_region
          _
        $region36: #{tpu_custom_call.1} parent=11 // pred_fallthru
          _
        // Predicated region
        $region37: #{tpu_custom_call.1} parent=11 // pred_check
          %p318 = pneg %p196
        $region38: #{tpu_custom_call.1} parent=11 // pred_check_branch
          %320 = sbr.rel (%p318) target = $region40
        $region39: #{tpu_custom_call.1} parent=11 // pred_region
          _
        $region40: #{tpu_custom_call.1} parent=11 // pred_fallthru
          _
        // Predicated region
        $region41: #{tpu_custom_call.1} parent=11 // pred_check
          %p321 = pneg %p217
        $region42: #{tpu_custom_call.1} parent=11 // pred_check_branch
          %323 = sbr.rel (%p321) target = $region44
        $region43: #{tpu_custom_call.1} parent=11 // pred_region
          _
        $region44: #{tpu_custom_call.1} parent=11 // pred_fallthru
          _
        // Predicated region
        $region45: #{tpu_custom_call.1} parent=11 // pred_check
          %p324 = pneg %p238
        $region46: #{tpu_custom_call.1} parent=11 // pred_check_branch
          %326 = sbr.rel (%p324) target = $region48
        $region47: #{tpu_custom_call.1} parent=11 // pred_region
          _
        $region48: #{tpu_custom_call.1} parent=11 // pred_fallthru
          _
        // Predicated region
        $region49: #{tpu_custom_call.1} parent=11 // pred_check
          %p327 = pneg %p259
        $region50: #{tpu_custom_call.1} parent=11 // pred_check_branch
          %329 = sbr.rel (%p327) target = $region52
        $region51: #{tpu_custom_call.1} parent=11 // pred_region
          _
        $region52: #{tpu_custom_call.1} parent=11 // pred_fallthru
          _
      $region12: #{tpu_custom_call.1} parent=5 // pred_fallthru
        _
      %p330 = scmp.lt.s32.totalorder %s23, 2
      // Predicated region
      $region53: #{tpu_custom_call.1} parent=5 // pred_check
        %p331 = pneg %p330
      $region54: #{tpu_custom_call.1} parent=5 // pred_check_branch
        %333 = sbr.rel (%p331) target = $region56
      $region55: #{tpu_custom_call.1} parent=5 // pred_region
        // Predicated region
        $region57: #{tpu_custom_call.1} parent=55 // pred_check
          %p334 = pneg %p43
        $region58: #{tpu_custom_call.1} parent=55 // pred_check_branch
          %336 = sbr.rel (%p334) target = $region60
        $region59: #{tpu_custom_call.1} parent=55 // pred_region
          %s337 = sand.u32 %s33, 1
          %s338 = scalar_lea.sflag [#allocation3], %s337
          %s339 = sand.u32 %s33, 1
          %s340 = smul.addr %s339, 256
          %s341 = scalar_lea.vmem [#allocation2], %s340
          %s342 = smul.u32 16, %s23
          %s344 = ssub.s32 4096, 4096
          %345 = vsyncadd %s338, %s344
          %s346 = smul.addr %s342, 2
          %s347 = smul.addr %s346, 128
          %s348 = scalar_lea.hbm %s0, %s347
          %s349 = sshll.u32 %s341, 4
          %s350 = int_to_ptr.vmem [resolvable:$true] %s349
          %355 = dma.hbm_to_vmem [thread:$0]  %s348, 4096, %s350, %s338, 128, 128, 8
        $region60: #{tpu_custom_call.1} parent=55 // pred_fallthru
          _
      $region56: #{tpu_custom_call.1} parent=5 // pred_fallthru
        _
      %p356 = scmp.le.s32.totalorder 1, %s23
      %p357 = scmp.lt.s32.totalorder %s23, 3
      %p358 = pnand %p356, %p357
      %p359 = pneg %p358
      // Predicated region
      $region61: #{tpu_custom_call.1} parent=5 // pred_check
        _
      $region62: #{tpu_custom_call.1} parent=5 // pred_check_branch
        %361 = sbr.rel (%p358) target = $region64
      $region63: #{tpu_custom_call.1} parent=5 // pred_region
        %s362 = ssub.s32 %s23, 1
        %s363 = sand.u32 %s36, 1
        %s364 = scalar_lea.sflag [#allocation3], %s363
        %s365 = sand.u32 %s36, 1
        %s366 = smul.addr %s365, 256
        %s367 = scalar_lea.vmem [#allocation2], %s366
        // Predicated region
        $region65: #{tpu_custom_call.1} parent=63 // pred_check
          %p368 = pneg %p49
        $region66: #{tpu_custom_call.1} parent=63 // pred_check_branch
          %370 = sbr.rel (%p368) target = $region68
        $region67: #{tpu_custom_call.1} parent=63 // pred_region
          %371 = dma.done %s364, 4096
        $region68: #{tpu_custom_call.1} parent=63 // pred_fallthru
          _
        %s372 = sand.u32 %s36, 1
        %s373 = scalar_lea.sflag [#allocation3], %s372
        %s374 = sand.u32 %s36, 1
        %s375 = smul.addr %s374, 256
        %s376 = scalar_lea.vmem [#allocation2], %s375
        %p377 = pneg %p49
        %p378 = pneg %p46
        %p379 = pneg %p70
        %p380 = pneg %p67
        %p381 = pneg %p91
        %p382 = pneg %p88
        %p383 = pneg %p112
        %p384 = pneg %p109
        %p385 = pneg %p133
        %p386 = pneg %p130
        %p387 = pneg %p154
        %p388 = pneg %p151
        %p389 = pneg %p175
        %p390 = pneg %p172
        %p391 = pneg %p196
        %p392 = pneg %p193
        %p393 = pneg %p217
        %p394 = pneg %p214
        %p395 = pneg %p238
        %p396 = pneg %p235
        %p397 = pneg %p259
        %p398 = pneg %p256
        %p399 = pneg %p285
        %p400 = pneg %p282
        %s401 = sand.u32 %s272, 1
        %s402 = scalar_lea.sflag [#allocation4], %s401
        %s403 = sand.u32 %s272, 1
        %s404 = smul.addr %s403, 256
        %s405 = scalar_lea.vmem [#allocation5], %s404
        %s406 = smul.u32 16, %s28
        %s407 = smul.u32 16, %s28
        %v408 = vld [vmem:[%s1] sm:$0xff]
        %v409 = vld [vmem:[%s1 + $0x8] sm:$0xff]
        %v410 = vld [vmem:[%s1 + $0x10] sm:$0xff]
        %v411 = vld [vmem:[%s1 + $0x18] sm:$0xff]
        %v412 = vld [vmem:[%s1 + $0x20] sm:$0xff]
        %v413 = vld [vmem:[%s1 + $0x28] sm:$0xff]
        %v414 = vld [vmem:[%s1 + $0x30] sm:$0xff]
        %v415 = vld [vmem:[%s1 + $0x38] sm:$0xff]
        %v416 = vld [vmem:[%s1 + $0x40] sm:$0xff]
        %v417 = vld [vmem:[%s1 + $0x48] sm:$0xff]
        %v418 = vld [vmem:[%s1 + $0x50] sm:$0xff]
        %v419 = vld [vmem:[%s1 + $0x58] sm:$0xff]
        %v420 = vld [vmem:[%s1 + $0x60] sm:$0xff]
        %v421 = vld [vmem:[%s1 + $0x68] sm:$0xff]
        %v422 = vld [vmem:[%s1 + $0x70] sm:$0xff]
        %v423 = vld [vmem:[%s1 + $0x78] sm:$0xff]
        %v424 = vld [vmem:[%s2] sm:$0xff]
        %v425 = vld [vmem:[%s2 + $0x8] sm:$0xff]
        %v426 = vld [vmem:[%s2 + $0x10] sm:$0xff]
        %v427 = vld [vmem:[%s2 + $0x18] sm:$0xff]
        %v428 = vld [vmem:[%s2 + $0x20] sm:$0xff]
        %v429 = vld [vmem:[%s2 + $0x28] sm:$0xff]
        %v430 = vld [vmem:[%s2 + $0x30] sm:$0xff]
        %v431 = vld [vmem:[%s2 + $0x38] sm:$0xff]
        %v432 = vld [vmem:[%s2 + $0x40] sm:$0xff]
        %v433 = vld [vmem:[%s2 + $0x48] sm:$0xff]
        %v434 = vld [vmem:[%s2 + $0x50] sm:$0xff]
        %v435 = vld [vmem:[%s2 + $0x58] sm:$0xff]
        %v436 = vld [vmem:[%s2 + $0x60] sm:$0xff]
        %v437 = vld [vmem:[%s2 + $0x68] sm:$0xff]
        %v438 = vld [vmem:[%s2 + $0x70] sm:$0xff]
        %v439 = vld [vmem:[%s2 + $0x78] sm:$0xff]
        %v440 = vld [vmem:[%s3] sm:$0xff]
        %v441 = vld [vmem:[%s3 + $0x8] sm:$0xff]
        %v442 = vld [vmem:[%s3 + $0x10] sm:$0xff]
        %v443 = vld [vmem:[%s3 + $0x18] sm:$0xff]
        %v444 = vld [vmem:[%s4] sm:$0xff]
        %v445 = vld [vmem:[%s4 + $0x8] sm:$0xff]
        %v446 = vld [vmem:[%s4 + $0x10] sm:$0xff]
        %v447 = vld [vmem:[%s4 + $0x18] sm:$0xff]
        %v448 = vld [vmem:[%s5] sm:$0x1]
        %v449 = vld [vmem:[%s6] sm:$0x1]
        %v450 = vld [vmem:[%s7] sm:$0xff]
        %v451 = vld [vmem:[%s7 + $0x8] sm:$0xff]
        %v452 = vld [vmem:[%s7 + $0x10] sm:$0xff]
        %v453 = vld [vmem:[%s7 + $0x18] sm:$0xff]
        %v454 = vld [vmem:[%s7 + $0x20] sm:$0xff]
        %v455 = vld [vmem:[%s7 + $0x28] sm:$0xff]
        %v456 = vld [vmem:[%s7 + $0x30] sm:$0xff]
        %v457 = vld [vmem:[%s7 + $0x38] sm:$0xff]
        %v458 = vld [vmem:[%s8] sm:$0xff]
        %v459 = vld [vmem:[%s8 + $0x8] sm:$0xff]
        %v460 = vld [vmem:[%s8 + $0x10] sm:$0xff]
        %v461 = vld [vmem:[%s8 + $0x18] sm:$0xff]
        %v462 = vld [vmem:[%s8 + $0x20] sm:$0xff]
        %v463 = vld [vmem:[%s8 + $0x28] sm:$0xff]
        %v464 = vld [vmem:[%s8 + $0x30] sm:$0xff]
        %v465 = vld [vmem:[%s8 + $0x38] sm:$0xff]
        %v466 = vld [vmem:[%s9] sm:$0x1]
        %v467 = vld [vmem:[%s10] sm:$0x1]
        %s468 = smul.u32 0, 16
        %s469 = scalar_lea.vmem %s367, %s468 [#allocation2]
        %v470 = vld [vmem:[%s469] sm:$0xff]
        %v471 = vld [vmem:[%s469 + $0x8] sm:$0xff]
        %v472 = vld [vmem:[%s469 + $0x10] sm:$0xff]
        %v473 = vld [vmem:[%s469 + $0x18] sm:$0xff]
        %v474 = vld [vmem:[%s469 + $0x20] sm:$0xff]
        %v475 = vld [vmem:[%s469 + $0x28] sm:$0xff]
        %v476 = vld [vmem:[%s469 + $0x30] sm:$0xff]
        %v477 = vld [vmem:[%s469 + $0x38] sm:$0xff]
        %v478 = vld [vmem:[%s469 + $0x40] sm:$0xff]
        %v479 = vld [vmem:[%s469 + $0x48] sm:$0xff]
        %v480 = vld [vmem:[%s469 + $0x50] sm:$0xff]
        %v481 = vld [vmem:[%s469 + $0x58] sm:$0xff]
        %v482 = vld [vmem:[%s469 + $0x60] sm:$0xff]
        %v483 = vld [vmem:[%s469 + $0x68] sm:$0xff]
        %v484 = vld [vmem:[%s469 + $0x70] sm:$0xff]
        %v485 = vld [vmem:[%s469 + $0x78] sm:$0xff]
        %486 = vmatprep.subr.mxu0 0.0
        %487 = vmatpush1.msra.mxu0 %v485
        %488 = vmatprep.subr.mxu0 0.0
        %489 = vmatpush1.msra.mxu0 %v484
        %490 = vmatprep.subr.mxu0 0.0
        %491 = vmatpush1.msra.mxu0 %v483
        %492 = vmatprep.subr.mxu0 0.0
        %493 = vmatpush1.msra.mxu0 %v482
        %494 = vmatprep.subr.mxu0 0.0
        %495 = vmatpush1.msra.mxu0 %v481
        %496 = vmatprep.subr.mxu0 0.0
        %497 = vmatpush1.msra.mxu0 %v480
        %498 = vmatprep.subr.mxu0 0.0
        %499 = vmatpush1.msra.mxu0 %v479
        %500 = vmatprep.subr.mxu0 0.0
        %501 = vmatpush1.msra.mxu0 %v478
        %502 = vmatprep.subr.mxu0 0.0
        %503 = vmatpush1.msra.mxu0 %v477
        %504 = vmatprep.subr.mxu0 0.0
        %505 = vmatpush1.msra.mxu0 %v476
        %506 = vmatprep.subr.mxu0 0.0
        %507 = vmatpush1.msra.mxu0 %v475
        %508 = vmatprep.subr.mxu0 0.0
        %509 = vmatpush1.msra.mxu0 %v474
        %510 = vmatprep.subr.mxu0 0.0
        %511 = vmatpush1.msra.mxu0 %v473
        %512 = vmatprep.subr.mxu0 0.0
        %513 = vmatpush1.msra.mxu0 %v472
        %514 = vmatprep.subr.mxu0 0.0
        %515 = vmatpush1.msra.mxu0 %v471
        %516 = vmatprep.subr.mxu0 0.0
        %517 = vmatpush1.msra.mxu0 %v470
        %518 = vmatprep.subr.mxu0 0.0
        %519 = vmatpush2.msra.mxu0 0.0
        %520 = vmatprep.subr.mxu0 0.0
        %521 = vmatpush2.msra.mxu0 0.0
        %522 = vmatprep.subr.mxu0 0.0
        %523 = vmatpush2.msra.mxu0 0.0
        %524 = vmatprep.subr.mxu0 0.0
        %525 = vmatpush2.msra.mxu0 0.0
        %526 = vmatprep.subr.mxu0 0.0
        %527 = vmatpush2.msra.mxu0 0.0
        %528 = vmatprep.subr.mxu0 0.0
        %529 = vmatpush2.msra.mxu0 0.0
        %530 = vmatprep.subr.mxu0 0.0
        %531 = vmatpush2.msra.mxu0 0.0
        %532 = vmatprep.subr.mxu0 0.0
        %533 = vmatpush2.msra.mxu0 0.0
        %534 = vmatprep.subr.mxu0 0.0
        %535 = vmatpush2.msra.mxu0 0.0
        %536 = vmatprep.subr.mxu0 0.0
        %537 = vmatpush2.msra.mxu0 0.0
        %538 = vmatprep.subr.mxu0 0.0
        %539 = vmatpush2.msra.mxu0 0.0
        %540 = vmatprep.subr.mxu0 0.0
        %541 = vmatpush2.msra.mxu0 0.0
        %542 = vmatprep.subr.mxu0 0.0
        %543 = vmatpush2.msra.mxu0 0.0
        %544 = vmatprep.subr.mxu0 0.0
        %545 = vmatpush2.msra.mxu0 0.0
        %546 = vmatprep.subr.mxu0 0.0
        %547 = vmatpush2.msra.mxu0 0.0
        %548 = vmatprep.subr.mxu0 0.0
        %549 = vmatpush2.msra.mxu0 0.0
        %550 = vmatprep.mubr.f32.mxu0 0.0
        %551 = vmatmul.mubr.f32.gmra.mxu0 %v424
        %v552 = vpop.f32.mrf.mxu0
        %v553 = vadd.f32 0.0, %v552
        %v554 = vpop.f32.mrf.mxu0
        %555 = vmatprep.mubr.f32.mxu0 0.0
        %556 = vmatmul.mubr.f32.gmra.mxu0 %v425
        %v557 = vpop.f32.mrf.mxu0
        %v558 = vadd.f32 0.0, %v557
        %v559 = vpop.f32.mrf.mxu0
        %560 = vmatprep.mubr.f32.mxu0 0.0
        %561 = vmatmul.mubr.f32.gmra.mxu0 %v426
        %v562 = vpop.f32.mrf.mxu0
        %v563 = vadd.f32 0.0, %v562
        %v564 = vpop.f32.mrf.mxu0
        %565 = vmatprep.mubr.f32.mxu0 0.0
        %566 = vmatmul.mubr.f32.gmra.mxu0 %v427
        %v567 = vpop.f32.mrf.mxu0
        %v568 = vadd.f32 0.0, %v567
        %v569 = vpop.f32.mrf.mxu0
        %570 = vmatprep.mubr.f32.mxu0 0.0
        %571 = vmatmul.mubr.f32.gmra.mxu0 %v428
        %v572 = vpop.f32.mrf.mxu0
        %v573 = vadd.f32 0.0, %v572
        %v574 = vpop.f32.mrf.mxu0
        %575 = vmatprep.mubr.f32.mxu0 0.0
        %576 = vmatmul.mubr.f32.gmra.mxu0 %v429
        %v577 = vpop.f32.mrf.mxu0
        %v578 = vadd.f32 0.0, %v577
        %v579 = vpop.f32.mrf.mxu0
        %580 = vmatprep.mubr.f32.mxu0 0.0
        %581 = vmatmul.mubr.f32.gmra.mxu0 %v430
        %v582 = vpop.f32.mrf.mxu0
        %v583 = vadd.f32 0.0, %v582
        %v584 = vpop.f32.mrf.mxu0
        %585 = vmatprep.mubr.f32.mxu0 0.0
        %586 = vmatmul.mubr.f32.gmra.mxu0 %v431
        %v587 = vpop.f32.mrf.mxu0
        %v588 = vadd.f32 0.0, %v587
        %v589 = vpop.f32.mrf.mxu0
        %590 = vmatprep.mubr.f32.mxu0 0.0
        %591 = vmatmul.mubr.f32.gmra.mxu0 %v432
        %v592 = vpop.f32.mrf.mxu0
        %v593 = vadd.f32 0.0, %v592
        %v594 = vpop.f32.mrf.mxu0
        %595 = vmatprep.mubr.f32.mxu0 0.0
        %596 = vmatmul.mubr.f32.gmra.mxu0 %v433
        %v597 = vpop.f32.mrf.mxu0
        %v598 = vadd.f32 0.0, %v597
        %v599 = vpop.f32.mrf.mxu0
        %600 = vmatprep.mubr.f32.mxu0 0.0
        %601 = vmatmul.mubr.f32.gmra.mxu0 %v434
        %v602 = vpop.f32.mrf.mxu0
        %v603 = vadd.f32 0.0, %v602
        %v604 = vpop.f32.mrf.mxu0
        %605 = vmatprep.mubr.f32.mxu0 0.0
        %606 = vmatmul.mubr.f32.gmra.mxu0 %v435
        %v607 = vpop.f32.mrf.mxu0
        %v608 = vadd.f32 0.0, %v607
        %v609 = vpop.f32.mrf.mxu0
        %610 = vmatprep.mubr.f32.mxu0 0.0
        %611 = vmatmul.mubr.f32.gmra.mxu0 %v436
        %v612 = vpop.f32.mrf.mxu0
        %v613 = vadd.f32 0.0, %v612
        %v614 = vpop.f32.mrf.mxu0
        %615 = vmatprep.mubr.f32.mxu0 0.0
        %616 = vmatmul.mubr.f32.gmra.mxu0 %v437
        %v617 = vpop.f32.mrf.mxu0
        %v618 = vadd.f32 0.0, %v617
        %v619 = vpop.f32.mrf.mxu0
        %620 = vmatprep.mubr.f32.mxu0 0.0
        %621 = vmatmul.mubr.f32.gmra.mxu0 %v438
        %v622 = vpop.f32.mrf.mxu0
        %v623 = vadd.f32 0.0, %v622
        %v624 = vpop.f32.mrf.mxu0
        %625 = vmatprep.mubr.f32.mxu0 0.0
        %626 = vmatmul.mubr.f32.gmra.mxu0 %v439
        %v627 = vpop.f32.mrf.mxu0
        %v628 = vadd.f32 0.0, %v627
        %v629 = vpop.f32.mrf.mxu0
        %630 = vdwg.mxu0
        %632 = vset.pattern.permute.xlu0 0
        %633 = vperm.xlu0 %632, %v408
        %v634 = vpop.permute.xlu0 %633
        %637 = vset.pattern.permute.xlu0 0
        %638 = vperm.xlu0 %637, %v409
        %v639 = vpop.permute.xlu0 %638
        %642 = vset.pattern.permute.xlu0 0
        %643 = vperm.xlu0 %642, %v410
        %v644 = vpop.permute.xlu0 %643
        %647 = vset.pattern.permute.xlu0 0
        %648 = vperm.xlu0 %647, %v411
        %v649 = vpop.permute.xlu0 %648
        %652 = vset.pattern.permute.xlu0 0
        %653 = vperm.xlu0 %652, %v412
        %v654 = vpop.permute.xlu0 %653
        %657 = vset.pattern.permute.xlu0 0
        %658 = vperm.xlu0 %657, %v413
        %v659 = vpop.permute.xlu0 %658
        %662 = vset.pattern.permute.xlu0 0
        %663 = vperm.xlu0 %662, %v414
        %v664 = vpop.permute.xlu0 %663
        %667 = vset.pattern.permute.xlu0 0
        %668 = vperm.xlu0 %667, %v415
        %v669 = vpop.permute.xlu0 %668
        %672 = vset.pattern.permute.xlu0 0
        %673 = vperm.xlu0 %672, %v416
        %v674 = vpop.permute.xlu0 %673
        %677 = vset.pattern.permute.xlu0 0
        %678 = vperm.xlu0 %677, %v417
        %v679 = vpop.permute.xlu0 %678
        %682 = vset.pattern.permute.xlu0 0
        %683 = vperm.xlu0 %682, %v418
        %v684 = vpop.permute.xlu0 %683
        %687 = vset.pattern.permute.xlu0 0
        %688 = vperm.xlu0 %687, %v419
        %v689 = vpop.permute.xlu0 %688
        %692 = vset.pattern.permute.xlu0 0
        %693 = vperm.xlu0 %692, %v420
        %v694 = vpop.permute.xlu0 %693
        %697 = vset.pattern.permute.xlu0 0
        %698 = vperm.xlu0 %697, %v421
        %v699 = vpop.permute.xlu0 %698
        %702 = vset.pattern.permute.xlu0 0
        %703 = vperm.xlu0 %702, %v422
        %v704 = vpop.permute.xlu0 %703
        %707 = vset.pattern.permute.xlu0 0
        %708 = vperm.xlu0 %707, %v423
        %v709 = vpop.permute.xlu0 %708
        %v711 = vmul.f32 %v634, %v470
        %v712 = vmul.f32 %v639, %v471
        %v713 = vmul.f32 %v644, %v472
        %v714 = vmul.f32 %v649, %v473
        %v715 = vmul.f32 %v654, %v474
        %v716 = vmul.f32 %v659, %v475
        %v717 = vmul.f32 %v664, %v476
        %v718 = vmul.f32 %v669, %v477
        %v719 = vmul.f32 %v674, %v478
        %v720 = vmul.f32 %v679, %v479
        %v721 = vmul.f32 %v684, %v480
        %v722 = vmul.f32 %v689, %v481
        %v723 = vmul.f32 %v694, %v482
        %v724 = vmul.f32 %v699, %v483
        %v725 = vmul.f32 %v704, %v484
        %v726 = vmul.f32 %v709, %v485
        %vm727 = vcmask 261120
        %v729 = vsel %vm727, %v553, 0
        %v732 = vsel %vm727, %v558, 0
        %v735 = vsel %vm727, %v563, 0
        %v738 = vsel %vm727, %v568, 0
        %v741 = vsel %vm727, %v573, 0
        %v744 = vsel %vm727, %v578, 0
        %v747 = vsel %vm727, %v583, 0
        %v750 = vsel %vm727, %v588, 0
        %v753 = vsel %vm727, %v593, 0
        %v756 = vsel %vm727, %v598, 0
        %v759 = vsel %vm727, %v603, 0
        %v762 = vsel %vm727, %v608, 0
        %v765 = vsel %vm727, %v613, 0
        %v768 = vsel %vm727, %v618, 0
        %v771 = vsel %vm727, %v623, 0
        %v774 = vsel %vm727, %v628, 0
        %776 = vmatprep.subr.mxu0 0.0
        %777 = vmatpush1.msra.mxu0 0.0
        %778 = vmatprep.subr.mxu0 0.0
        %779 = vmatpush1.msra.mxu0 0.0
        %780 = vmatprep.subr.mxu0 0.0
        %781 = vmatpush1.msra.mxu0 0.0
        %782 = vmatprep.subr.mxu0 0.0
        %783 = vmatpush1.msra.mxu0 0.0
        %784 = vmatprep.subr.mxu0 0.0
        %785 = vmatpush1.msra.mxu0 0.0
        %786 = vmatprep.subr.mxu0 0.0
        %787 = vmatpush1.msra.mxu0 0.0
        %788 = vmatprep.subr.mxu0 0.0
        %789 = vmatpush1.msra.mxu0 0.0
        %790 = vmatprep.subr.mxu0 0.0
        %791 = vmatpush1.msra.mxu0 0.0
        %792 = vmatprep.subr.mxu0 0.0
        %793 = vmatpush1.msra.mxu0 0.0
        %794 = vmatprep.subr.mxu0 0.0
        %795 = vmatpush1.msra.mxu0 0.0
        %796 = vmatprep.subr.mxu0 0.0
        %797 = vmatpush1.msra.mxu0 0.0
        %798 = vmatprep.subr.mxu0 0.0
        %799 = vmatpush1.msra.mxu0 0.0
        %800 = vmatprep.subr.mxu0 0.0
        %801 = vmatpush1.msra.mxu0 %v447
        %802 = vmatprep.subr.mxu0 0.0
        %803 = vmatpush1.msra.mxu0 %v446
        %804 = vmatprep.subr.mxu0 0.0
        %805 = vmatpush1.msra.mxu0 %v445
        %806 = vmatprep.subr.mxu0 0.0
        %807 = vmatpush1.msra.mxu0 %v444
        %808 = vmatprep.subr.mxu0 0.0
        %809 = vmatpush2.msra.mxu0 0.0
        %810 = vmatprep.subr.mxu0 0.0
        %811 = vmatpush2.msra.mxu0 0.0
        %812 = vmatprep.subr.mxu0 0.0
        %813 = vmatpush2.msra.mxu0 0.0
        %814 = vmatprep.subr.mxu0 0.0
        %815 = vmatpush2.msra.mxu0 0.0
        %816 = vmatprep.subr.mxu0 0.0
        %817 = vmatpush2.msra.mxu0 0.0
        %818 = vmatprep.subr.mxu0 0.0
        %819 = vmatpush2.msra.mxu0 0.0
        %820 = vmatprep.subr.mxu0 0.0
        %821 = vmatpush2.msra.mxu0 0.0
        %822 = vmatprep.subr.mxu0 0.0
        %823 = vmatpush2.msra.mxu0 0.0
        %824 = vmatprep.subr.mxu0 0.0
        %825 = vmatpush2.msra.mxu0 0.0
        %826 = vmatprep.subr.mxu0 0.0
        %827 = vmatpush2.msra.mxu0 0.0
        %828 = vmatprep.subr.mxu0 0.0
        %829 = vmatpush2.msra.mxu0 0.0
        %830 = vmatprep.subr.mxu0 0.0
        %831 = vmatpush2.msra.mxu0 0.0
        %832 = vmatprep.subr.mxu0 0.0
        %833 = vmatpush2.msra.mxu0 0.0
        %834 = vmatprep.subr.mxu0 0.0
        %835 = vmatpush2.msra.mxu0 0.0
        %836 = vmatprep.subr.mxu0 0.0
        %837 = vmatpush2.msra.mxu0 0.0
        %838 = vmatprep.subr.mxu0 0.0
        %839 = vmatpush2.msra.mxu0 0.0
        %840 = vmatprep.mubr.f32.mxu0 0.0
        %841 = vmatmul.mubr.f32.gmra.mxu0 %v729
        %v842 = vpop.f32.mrf.mxu0
        %v843 = vadd.f32 0.0, %v842
        %v844 = vpop.f32.mrf.mxu0
        %845 = vmatprep.mubr.f32.mxu0 0.0
        %846 = vmatmul.mubr.f32.gmra.mxu0 %v732
        %v847 = vpop.f32.mrf.mxu0
        %v848 = vadd.f32 0.0, %v847
        %v849 = vpop.f32.mrf.mxu0
        %850 = vmatprep.mubr.f32.mxu0 0.0
        %851 = vmatmul.mubr.f32.gmra.mxu0 %v735
        %v852 = vpop.f32.mrf.mxu0
        %v853 = vadd.f32 0.0, %v852
        %v854 = vpop.f32.mrf.mxu0
        %855 = vmatprep.mubr.f32.mxu0 0.0
        %856 = vmatmul.mubr.f32.gmra.mxu0 %v738
        %v857 = vpop.f32.mrf.mxu0
        %v858 = vadd.f32 0.0, %v857
        %v859 = vpop.f32.mrf.mxu0
        %860 = vmatprep.mubr.f32.mxu0 0.0
        %861 = vmatmul.mubr.f32.gmra.mxu0 %v741
        %v862 = vpop.f32.mrf.mxu0
        %v863 = vadd.f32 0.0, %v862
        %v864 = vpop.f32.mrf.mxu0
        %865 = vmatprep.mubr.f32.mxu0 0.0
        %866 = vmatmul.mubr.f32.gmra.mxu0 %v744
        %v867 = vpop.f32.mrf.mxu0
        %v868 = vadd.f32 0.0, %v867
        %v869 = vpop.f32.mrf.mxu0
        %870 = vmatprep.mubr.f32.mxu0 0.0
        %871 = vmatmul.mubr.f32.gmra.mxu0 %v747
        %v872 = vpop.f32.mrf.mxu0
        %v873 = vadd.f32 0.0, %v872
        %v874 = vpop.f32.mrf.mxu0
        %875 = vmatprep.mubr.f32.mxu0 0.0
        %876 = vmatmul.mubr.f32.gmra.mxu0 %v750
        %v877 = vpop.f32.mrf.mxu0
        %v878 = vadd.f32 0.0, %v877
        %v879 = vpop.f32.mrf.mxu0
        %880 = vmatprep.mubr.f32.mxu0 0.0
        %881 = vmatmul.mubr.f32.gmra.mxu0 %v753
        %v882 = vpop.f32.mrf.mxu0
        %v883 = vadd.f32 0.0, %v882
        %v884 = vpop.f32.mrf.mxu0
        %885 = vmatprep.mubr.f32.mxu0 0.0
        %886 = vmatmul.mubr.f32.gmra.mxu0 %v756
        %v887 = vpop.f32.mrf.mxu0
        %v888 = vadd.f32 0.0, %v887
        %v889 = vpop.f32.mrf.mxu0
        %890 = vmatprep.mubr.f32.mxu0 0.0
        %891 = vmatmul.mubr.f32.gmra.mxu0 %v759
        %v892 = vpop.f32.mrf.mxu0
        %v893 = vadd.f32 0.0, %v892
        %v894 = vpop.f32.mrf.mxu0
        %895 = vmatprep.mubr.f32.mxu0 0.0
        %896 = vmatmul.mubr.f32.gmra.mxu0 %v762
        %v897 = vpop.f32.mrf.mxu0
        %v898 = vadd.f32 0.0, %v897
        %v899 = vpop.f32.mrf.mxu0
        %900 = vmatprep.mubr.f32.mxu0 0.0
        %901 = vmatmul.mubr.f32.gmra.mxu0 %v765
        %v902 = vpop.f32.mrf.mxu0
        %v903 = vadd.f32 0.0, %v902
        %v904 = vpop.f32.mrf.mxu0
        %905 = vmatprep.mubr.f32.mxu0 0.0
        %906 = vmatmul.mubr.f32.gmra.mxu0 %v768
        %v907 = vpop.f32.mrf.mxu0
        %v908 = vadd.f32 0.0, %v907
        %v909 = vpop.f32.mrf.mxu0
        %910 = vmatprep.mubr.f32.mxu0 0.0
        %911 = vmatmul.mubr.f32.gmra.mxu0 %v771
        %v912 = vpop.f32.mrf.mxu0
        %v913 = vadd.f32 0.0, %v912
        %v914 = vpop.f32.mrf.mxu0
        %915 = vmatprep.mubr.f32.mxu0 0.0
        %916 = vmatmul.mubr.f32.gmra.mxu0 %v774
        %v917 = vpop.f32.mrf.mxu0
        %v918 = vadd.f32 0.0, %v917
        %v919 = vpop.f32.mrf.mxu0
        %920 = vdwg.mxu0
        %v922 = vsel %vm727, %v711, 0
        %v925 = vsel %vm727, %v712, 0
        %v928 = vsel %vm727, %v713, 0
        %v931 = vsel %vm727, %v714, 0
        %v934 = vsel %vm727, %v715, 0
        %v937 = vsel %vm727, %v716, 0
        %v940 = vsel %vm727, %v717, 0
        %v943 = vsel %vm727, %v718, 0
        %v946 = vsel %vm727, %v719, 0
        %v949 = vsel %vm727, %v720, 0
        %v952 = vsel %vm727, %v721, 0
        %v955 = vsel %vm727, %v722, 0
        %v958 = vsel %vm727, %v723, 0
        %v961 = vsel %vm727, %v724, 0
        %v964 = vsel %vm727, %v725, 0
        %v967 = vsel %vm727, %v726, 0
        %969 = vmatprep.subr.mxu0 0.0
        %970 = vmatpush1.msra.mxu0 0.0
        %971 = vmatprep.subr.mxu0 0.0
        %972 = vmatpush1.msra.mxu0 0.0
        %973 = vmatprep.subr.mxu0 0.0
        %974 = vmatpush1.msra.mxu0 0.0
        %975 = vmatprep.subr.mxu0 0.0
        %976 = vmatpush1.msra.mxu0 0.0
        %977 = vmatprep.subr.mxu0 0.0
        %978 = vmatpush1.msra.mxu0 0.0
        %979 = vmatprep.subr.mxu0 0.0
        %980 = vmatpush1.msra.mxu0 0.0
        %981 = vmatprep.subr.mxu0 0.0
        %982 = vmatpush1.msra.mxu0 0.0
        %983 = vmatprep.subr.mxu0 0.0
        %984 = vmatpush1.msra.mxu0 0.0
        %985 = vmatprep.subr.mxu0 0.0
        %986 = vmatpush1.msra.mxu0 0.0
        %987 = vmatprep.subr.mxu0 0.0
        %988 = vmatpush1.msra.mxu0 0.0
        %989 = vmatprep.subr.mxu0 0.0
        %990 = vmatpush1.msra.mxu0 0.0
        %991 = vmatprep.subr.mxu0 0.0
        %992 = vmatpush1.msra.mxu0 0.0
        %993 = vmatprep.subr.mxu0 0.0
        %994 = vmatpush1.msra.mxu0 %v443
        %995 = vmatprep.subr.mxu0 0.0
        %996 = vmatpush1.msra.mxu0 %v442
        %997 = vmatprep.subr.mxu0 0.0
        %998 = vmatpush1.msra.mxu0 %v441
        %999 = vmatprep.subr.mxu0 0.0
        %1000 = vmatpush1.msra.mxu0 %v440
        %1001 = vmatprep.subr.mxu0 0.0
        %1002 = vmatpush2.msra.mxu0 0.0
        %1003 = vmatprep.subr.mxu0 0.0
        %1004 = vmatpush2.msra.mxu0 0.0
        %1005 = vmatprep.subr.mxu0 0.0
        %1006 = vmatpush2.msra.mxu0 0.0
        %1007 = vmatprep.subr.mxu0 0.0
        %1008 = vmatpush2.msra.mxu0 0.0
        %1009 = vmatprep.subr.mxu0 0.0
        %1010 = vmatpush2.msra.mxu0 0.0
        %1011 = vmatprep.subr.mxu0 0.0
        %1012 = vmatpush2.msra.mxu0 0.0
        %1013 = vmatprep.subr.mxu0 0.0
        %1014 = vmatpush2.msra.mxu0 0.0
        %1015 = vmatprep.subr.mxu0 0.0
        %1016 = vmatpush2.msra.mxu0 0.0
        %1017 = vmatprep.subr.mxu0 0.0
        %1018 = vmatpush2.msra.mxu0 0.0
        %1019 = vmatprep.subr.mxu0 0.0
        %1020 = vmatpush2.msra.mxu0 0.0
        %1021 = vmatprep.subr.mxu0 0.0
        %1022 = vmatpush2.msra.mxu0 0.0
        %1023 = vmatprep.subr.mxu0 0.0
        %1024 = vmatpush2.msra.mxu0 0.0
        %1025 = vmatprep.subr.mxu0 0.0
        %1026 = vmatpush2.msra.mxu0 0.0
        %1027 = vmatprep.subr.mxu0 0.0
        %1028 = vmatpush2.msra.mxu0 0.0
        %1029 = vmatprep.subr.mxu0 0.0
        %1030 = vmatpush2.msra.mxu0 0.0
        %1031 = vmatprep.subr.mxu0 0.0
        %1032 = vmatpush2.msra.mxu0 0.0
        %1033 = vmatprep.mubr.f32.mxu0 0.0
        %1034 = vmatmul.mubr.f32.gmra.mxu0 %v922
        %v1035 = vpop.f32.mrf.mxu0
        %v1036 = vadd.f32 %v843, %v1035
        %v1037 = vpop.f32.mrf.mxu0
        %1038 = vmatprep.mubr.f32.mxu0 0.0
        %1039 = vmatmul.mubr.f32.gmra.mxu0 %v925
        %v1040 = vpop.f32.mrf.mxu0
        %v1041 = vadd.f32 %v848, %v1040
        %v1042 = vpop.f32.mrf.mxu0
        %1043 = vmatprep.mubr.f32.mxu0 0.0
        %1044 = vmatmul.mubr.f32.gmra.mxu0 %v928
        %v1045 = vpop.f32.mrf.mxu0
        %v1046 = vadd.f32 %v853, %v1045
        %v1047 = vpop.f32.mrf.mxu0
        %1048 = vmatprep.mubr.f32.mxu0 0.0
        %1049 = vmatmul.mubr.f32.gmra.mxu0 %v931
        %v1050 = vpop.f32.mrf.mxu0
        %v1051 = vadd.f32 %v858, %v1050
        %v1052 = vpop.f32.mrf.mxu0
        %1053 = vmatprep.mubr.f32.mxu0 0.0
        %1054 = vmatmul.mubr.f32.gmra.mxu0 %v934
        %v1055 = vpop.f32.mrf.mxu0
        %v1056 = vadd.f32 %v863, %v1055
        %v1057 = vpop.f32.mrf.mxu0
        %1058 = vmatprep.mubr.f32.mxu0 0.0
        %1059 = vmatmul.mubr.f32.gmra.mxu0 %v937
        %v1060 = vpop.f32.mrf.mxu0
        %v1061 = vadd.f32 %v868, %v1060
        %v1062 = vpop.f32.mrf.mxu0
        %1063 = vmatprep.mubr.f32.mxu0 0.0
        %1064 = vmatmul.mubr.f32.gmra.mxu0 %v940
        %v1065 = vpop.f32.mrf.mxu0
        %v1066 = vadd.f32 %v873, %v1065
        %v1067 = vpop.f32.mrf.mxu0
        %1068 = vmatprep.mubr.f32.mxu0 0.0
        %1069 = vmatmul.mubr.f32.gmra.mxu0 %v943
        %v1070 = vpop.f32.mrf.mxu0
        %v1071 = vadd.f32 %v878, %v1070
        %v1072 = vpop.f32.mrf.mxu0
        %1073 = vmatprep.mubr.f32.mxu0 0.0
        %1074 = vmatmul.mubr.f32.gmra.mxu0 %v946
        %v1075 = vpop.f32.mrf.mxu0
        %v1076 = vadd.f32 %v883, %v1075
        %v1077 = vpop.f32.mrf.mxu0
        %1078 = vmatprep.mubr.f32.mxu0 0.0
        %1079 = vmatmul.mubr.f32.gmra.mxu0 %v949
        %v1080 = vpop.f32.mrf.mxu0
        %v1081 = vadd.f32 %v888, %v1080
        %v1082 = vpop.f32.mrf.mxu0
        %1083 = vmatprep.mubr.f32.mxu0 0.0
        %1084 = vmatmul.mubr.f32.gmra.mxu0 %v952
        %v1085 = vpop.f32.mrf.mxu0
        %v1086 = vadd.f32 %v893, %v1085
        %v1087 = vpop.f32.mrf.mxu0
        %1088 = vmatprep.mubr.f32.mxu0 0.0
        %1089 = vmatmul.mubr.f32.gmra.mxu0 %v955
        %v1090 = vpop.f32.mrf.mxu0
        %v1091 = vadd.f32 %v898, %v1090
        %v1092 = vpop.f32.mrf.mxu0
        %1093 = vmatprep.mubr.f32.mxu0 0.0
        %1094 = vmatmul.mubr.f32.gmra.mxu0 %v958
        %v1095 = vpop.f32.mrf.mxu0
        %v1096 = vadd.f32 %v903, %v1095
        %v1097 = vpop.f32.mrf.mxu0
        %1098 = vmatprep.mubr.f32.mxu0 0.0
        %1099 = vmatmul.mubr.f32.gmra.mxu0 %v961
        %v1100 = vpop.f32.mrf.mxu0
        %v1101 = vadd.f32 %v908, %v1100
        %v1102 = vpop.f32.mrf.mxu0
        %1103 = vmatprep.mubr.f32.mxu0 0.0
        %1104 = vmatmul.mubr.f32.gmra.mxu0 %v964
        %v1105 = vpop.f32.mrf.mxu0
        %v1106 = vadd.f32 %v913, %v1105
        %v1107 = vpop.f32.mrf.mxu0
        %1108 = vmatprep.mubr.f32.mxu0 0.0
        %1109 = vmatmul.mubr.f32.gmra.mxu0 %v967
        %v1110 = vpop.f32.mrf.mxu0
        %v1111 = vadd.f32 %v918, %v1110
        %v1112 = vpop.f32.mrf.mxu0
        %1113 = vdwg.mxu0
        %v1115 = vlaneseq
        %v1116 = vshrl.u32 %v1115, 7
        %v1117 = vsub.s32 0, %v1116
        %v1118 = vrot.slane %v448, %v1117
        %v1120 = vmul.f32 %v1036, %v1118
        %v1121 = vmul.f32 %v1041, %v1118
        %v1122 = vmul.f32 %v1046, %v1118
        %v1123 = vmul.f32 %v1051, %v1118
        %v1124 = vmul.f32 %v1056, %v1118
        %v1125 = vmul.f32 %v1061, %v1118
        %v1126 = vmul.f32 %v1066, %v1118
        %v1127 = vmul.f32 %v1071, %v1118
        %v1128 = vmul.f32 %v1076, %v1118
        %v1129 = vmul.f32 %v1081, %v1118
        %v1130 = vmul.f32 %v1086, %v1118
        %v1131 = vmul.f32 %v1091, %v1118
        %v1132 = vmul.f32 %v1096, %v1118
        %v1133 = vmul.f32 %v1101, %v1118
        %v1134 = vmul.f32 %v1106, %v1118
        %v1135 = vmul.f32 %v1111, %v1118
        %v1137 = vlaneseq
        %v1138 = vshrl.u32 %v1137, 7
        %v1139 = vsub.s32 0, %v1138
        %v1140 = vrot.slane %v449, %v1139
        %v1142 = vadd.f32 %v1120, %v1140
        %v1143 = vadd.f32 %v1121, %v1140
        %v1144 = vadd.f32 %v1122, %v1140
        %v1145 = vadd.f32 %v1123, %v1140
        %v1146 = vadd.f32 %v1124, %v1140
        %v1147 = vadd.f32 %v1125, %v1140
        %v1148 = vadd.f32 %v1126, %v1140
        %v1149 = vadd.f32 %v1127, %v1140
        %v1150 = vadd.f32 %v1128, %v1140
        %v1151 = vadd.f32 %v1129, %v1140
        %v1152 = vadd.f32 %v1130, %v1140
        %v1153 = vadd.f32 %v1131, %v1140
        %v1154 = vadd.f32 %v1132, %v1140
        %v1155 = vadd.f32 %v1133, %v1140
        %v1156 = vadd.f32 %v1134, %v1140
        %v1157 = vadd.f32 %v1135, %v1140
        %v1158 = vmax.f32 %v1142, 0.0
        %v1159 = vmax.f32 %v1143, 0.0
        %v1160 = vmax.f32 %v1144, 0.0
        %v1161 = vmax.f32 %v1145, 0.0
        %v1162 = vmax.f32 %v1146, 0.0
        %v1163 = vmax.f32 %v1147, 0.0
        %v1164 = vmax.f32 %v1148, 0.0
        %v1165 = vmax.f32 %v1149, 0.0
        %v1166 = vmax.f32 %v1150, 0.0
        %v1167 = vmax.f32 %v1151, 0.0
        %v1168 = vmax.f32 %v1152, 0.0
        %v1169 = vmax.f32 %v1153, 0.0
        %v1170 = vmax.f32 %v1154, 0.0
        %v1171 = vmax.f32 %v1155, 0.0
        %v1172 = vmax.f32 %v1156, 0.0
        %v1173 = vmax.f32 %v1157, 0.0
        %vm1174 = vcmask 523264
        %v1176 = vsel %vm1174, %v1158, 0
        %v1179 = vsel %vm1174, %v1159, 0
        %v1182 = vsel %vm1174, %v1160, 0
        %v1185 = vsel %vm1174, %v1161, 0
        %v1188 = vsel %vm1174, %v1162, 0
        %v1191 = vsel %vm1174, %v1163, 0
        %v1194 = vsel %vm1174, %v1164, 0
        %v1197 = vsel %vm1174, %v1165, 0
        %v1200 = vsel %vm1174, %v1166, 0
        %v1203 = vsel %vm1174, %v1167, 0
        %v1206 = vsel %vm1174, %v1168, 0
        %v1209 = vsel %vm1174, %v1169, 0
        %v1212 = vsel %vm1174, %v1170, 0
        %v1215 = vsel %vm1174, %v1171, 0
        %v1218 = vsel %vm1174, %v1172, 0
        %v1221 = vsel %vm1174, %v1173, 0
        %1223 = vmatprep.subr.mxu0 0.0
        %1224 = vmatpush1.msra.mxu0 0.0
        %1225 = vmatprep.subr.mxu0 0.0
        %1226 = vmatpush1.msra.mxu0 0.0
        %1227 = vmatprep.subr.mxu0 0.0
        %1228 = vmatpush1.msra.mxu0 0.0
        %1229 = vmatprep.subr.mxu0 0.0
        %1230 = vmatpush1.msra.mxu0 0.0
        %1231 = vmatprep.subr.mxu0 0.0
        %1232 = vmatpush1.msra.mxu0 0.0
        %1233 = vmatprep.subr.mxu0 0.0
        %1234 = vmatpush1.msra.mxu0 0.0
        %1235 = vmatprep.subr.mxu0 0.0
        %1236 = vmatpush1.msra.mxu0 0.0
        %1237 = vmatprep.subr.mxu0 0.0
        %1238 = vmatpush1.msra.mxu0 0.0
        %1239 = vmatprep.subr.mxu0 0.0
        %1240 = vmatpush1.msra.mxu0 %v457
        %1241 = vmatprep.subr.mxu0 0.0
        %1242 = vmatpush1.msra.mxu0 %v456
        %1243 = vmatprep.subr.mxu0 0.0
        %1244 = vmatpush1.msra.mxu0 %v455
        %1245 = vmatprep.subr.mxu0 0.0
        %1246 = vmatpush1.msra.mxu0 %v454
        %1247 = vmatprep.subr.mxu0 0.0
        %1248 = vmatpush1.msra.mxu0 %v453
        %1249 = vmatprep.subr.mxu0 0.0
        %1250 = vmatpush1.msra.mxu0 %v452
        %1251 = vmatprep.subr.mxu0 0.0
        %1252 = vmatpush1.msra.mxu0 %v451
        %1253 = vmatprep.subr.mxu0 0.0
        %1254 = vmatpush1.msra.mxu0 %v450
        %1255 = vmatprep.subr.mxu0 0.0
        %1256 = vmatpush2.msra.mxu0 0.0
        %1257 = vmatprep.subr.mxu0 0.0
        %1258 = vmatpush2.msra.mxu0 0.0
        %1259 = vmatprep.subr.mxu0 0.0
        %1260 = vmatpush2.msra.mxu0 0.0
        %1261 = vmatprep.subr.mxu0 0.0
        %1262 = vmatpush2.msra.mxu0 0.0
        %1263 = vmatprep.subr.mxu0 0.0
        %1264 = vmatpush2.msra.mxu0 0.0
        %1265 = vmatprep.subr.mxu0 0.0
        %1266 = vmatpush2.msra.mxu0 0.0
        %1267 = vmatprep.subr.mxu0 0.0
        %1268 = vmatpush2.msra.mxu0 0.0
        %1269 = vmatprep.subr.mxu0 0.0
        %1270 = vmatpush2.msra.mxu0 0.0
        %1271 = vmatprep.subr.mxu0 0.0
        %1272 = vmatpush2.msra.mxu0 0.0
        %1273 = vmatprep.subr.mxu0 0.0
        %1274 = vmatpush2.msra.mxu0 0.0
        %1275 = vmatprep.subr.mxu0 0.0
        %1276 = vmatpush2.msra.mxu0 0.0
        %1277 = vmatprep.subr.mxu0 0.0
        %1278 = vmatpush2.msra.mxu0 0.0
        %1279 = vmatprep.subr.mxu0 0.0
        %1280 = vmatpush2.msra.mxu0 0.0
        %1281 = vmatprep.subr.mxu0 0.0
        %1282 = vmatpush2.msra.mxu0 0.0
        %1283 = vmatprep.subr.mxu0 0.0
        %1284 = vmatpush2.msra.mxu0 0.0
        %1285 = vmatprep.subr.mxu0 0.0
        %1286 = vmatpush2.msra.mxu0 0.0
        %1287 = vmatprep.mubr.f32.mxu0 0.0
        %1288 = vmatmul.mubr.f32.gmra.mxu0 %v1176
        %v1289 = vpop.f32.mrf.mxu0
        %v1290 = vadd.f32 0.0, %v1289
        %v1291 = vpop.f32.mrf.mxu0
        %1292 = vmatprep.mubr.f32.mxu0 0.0
        %1293 = vmatmul.mubr.f32.gmra.mxu0 %v1179
        %v1294 = vpop.f32.mrf.mxu0
        %v1295 = vadd.f32 0.0, %v1294
        %v1296 = vpop.f32.mrf.mxu0
        %1297 = vmatprep.mubr.f32.mxu0 0.0
        %1298 = vmatmul.mubr.f32.gmra.mxu0 %v1182
        %v1299 = vpop.f32.mrf.mxu0
        %v1300 = vadd.f32 0.0, %v1299
        %v1301 = vpop.f32.mrf.mxu0
        %1302 = vmatprep.mubr.f32.mxu0 0.0
        %1303 = vmatmul.mubr.f32.gmra.mxu0 %v1185
        %v1304 = vpop.f32.mrf.mxu0
        %v1305 = vadd.f32 0.0, %v1304
        %v1306 = vpop.f32.mrf.mxu0
        %1307 = vmatprep.mubr.f32.mxu0 0.0
        %1308 = vmatmul.mubr.f32.gmra.mxu0 %v1188
        %v1309 = vpop.f32.mrf.mxu0
        %v1310 = vadd.f32 0.0, %v1309
        %v1311 = vpop.f32.mrf.mxu0
        %1312 = vmatprep.mubr.f32.mxu0 0.0
        %1313 = vmatmul.mubr.f32.gmra.mxu0 %v1191
        %v1314 = vpop.f32.mrf.mxu0
        %v1315 = vadd.f32 0.0, %v1314
        %v1316 = vpop.f32.mrf.mxu0
        %1317 = vmatprep.mubr.f32.mxu0 0.0
        %1318 = vmatmul.mubr.f32.gmra.mxu0 %v1194
        %v1319 = vpop.f32.mrf.mxu0
        %v1320 = vadd.f32 0.0, %v1319
        %v1321 = vpop.f32.mrf.mxu0
        %1322 = vmatprep.mubr.f32.mxu0 0.0
        %1323 = vmatmul.mubr.f32.gmra.mxu0 %v1197
        %v1324 = vpop.f32.mrf.mxu0
        %v1325 = vadd.f32 0.0, %v1324
        %v1326 = vpop.f32.mrf.mxu0
        %1327 = vmatprep.mubr.f32.mxu0 0.0
        %1328 = vmatmul.mubr.f32.gmra.mxu0 %v1200
        %v1329 = vpop.f32.mrf.mxu0
        %v1330 = vadd.f32 0.0, %v1329
        %v1331 = vpop.f32.mrf.mxu0
        %1332 = vmatprep.mubr.f32.mxu0 0.0
        %1333 = vmatmul.mubr.f32.gmra.mxu0 %v1203
        %v1334 = vpop.f32.mrf.mxu0
        %v1335 = vadd.f32 0.0, %v1334
        %v1336 = vpop.f32.mrf.mxu0
        %1337 = vmatprep.mubr.f32.mxu0 0.0
        %1338 = vmatmul.mubr.f32.gmra.mxu0 %v1206
        %v1339 = vpop.f32.mrf.mxu0
        %v1340 = vadd.f32 0.0, %v1339
        %v1341 = vpop.f32.mrf.mxu0
        %1342 = vmatprep.mubr.f32.mxu0 0.0
        %1343 = vmatmul.mubr.f32.gmra.mxu0 %v1209
        %v1344 = vpop.f32.mrf.mxu0
        %v1345 = vadd.f32 0.0, %v1344
        %v1346 = vpop.f32.mrf.mxu0
        %1347 = vmatprep.mubr.f32.mxu0 0.0
        %1348 = vmatmul.mubr.f32.gmra.mxu0 %v1212
        %v1349 = vpop.f32.mrf.mxu0
        %v1350 = vadd.f32 0.0, %v1349
        %v1351 = vpop.f32.mrf.mxu0
        %1352 = vmatprep.mubr.f32.mxu0 0.0
        %1353 = vmatmul.mubr.f32.gmra.mxu0 %v1215
        %v1354 = vpop.f32.mrf.mxu0
        %v1355 = vadd.f32 0.0, %v1354
        %v1356 = vpop.f32.mrf.mxu0
        %1357 = vmatprep.mubr.f32.mxu0 0.0
        %1358 = vmatmul.mubr.f32.gmra.mxu0 %v1218
        %v1359 = vpop.f32.mrf.mxu0
        %v1360 = vadd.f32 0.0, %v1359
        %v1361 = vpop.f32.mrf.mxu0
        %1362 = vmatprep.mubr.f32.mxu0 0.0
        %1363 = vmatmul.mubr.f32.gmra.mxu0 %v1221
        %v1364 = vpop.f32.mrf.mxu0
        %v1365 = vadd.f32 0.0, %v1364
        %v1366 = vpop.f32.mrf.mxu0
        %1367 = vdwg.mxu0
        %1368 = vmatprep.subr.mxu0 0.0
        %1369 = vmatpush1.msra.mxu0 0.0
        %1370 = vmatprep.subr.mxu0 0.0
        %1371 = vmatpush1.msra.mxu0 0.0
        %1372 = vmatprep.subr.mxu0 0.0
        %1373 = vmatpush1.msra.mxu0 0.0
        %1374 = vmatprep.subr.mxu0 0.0
        %1375 = vmatpush1.msra.mxu0 0.0
        %1376 = vmatprep.subr.mxu0 0.0
        %1377 = vmatpush1.msra.mxu0 0.0
        %1378 = vmatprep.subr.mxu0 0.0
        %1379 = vmatpush1.msra.mxu0 0.0
        %1380 = vmatprep.subr.mxu0 0.0
        %1381 = vmatpush1.msra.mxu0 0.0
        %1382 = vmatprep.subr.mxu0 0.0
        %1383 = vmatpush1.msra.mxu0 0.0
        %1384 = vmatprep.subr.mxu0 0.0
        %1385 = vmatpush1.msra.mxu0 %v465
        %1386 = vmatprep.subr.mxu0 0.0
        %1387 = vmatpush1.msra.mxu0 %v464
        %1388 = vmatprep.subr.mxu0 0.0
        %1389 = vmatpush1.msra.mxu0 %v463
        %1390 = vmatprep.subr.mxu0 0.0
        %1391 = vmatpush1.msra.mxu0 %v462
        %1392 = vmatprep.subr.mxu0 0.0
        %1393 = vmatpush1.msra.mxu0 %v461
        %1394 = vmatprep.subr.mxu0 0.0
        %1395 = vmatpush1.msra.mxu0 %v460
        %1396 = vmatprep.subr.mxu0 0.0
        %1397 = vmatpush1.msra.mxu0 %v459
        %1398 = vmatprep.subr.mxu0 0.0
        %1399 = vmatpush1.msra.mxu0 %v458
        %1400 = vmatprep.subr.mxu0 0.0
        %1401 = vmatpush2.msra.mxu0 0.0
        %1402 = vmatprep.subr.mxu0 0.0
        %1403 = vmatpush2.msra.mxu0 0.0
        %1404 = vmatprep.subr.mxu0 0.0
        %1405 = vmatpush2.msra.mxu0 0.0
        %1406 = vmatprep.subr.mxu0 0.0
        %1407 = vmatpush2.msra.mxu0 0.0
        %1408 = vmatprep.subr.mxu0 0.0
        %1409 = vmatpush2.msra.mxu0 0.0
        %1410 = vmatprep.subr.mxu0 0.0
        %1411 = vmatpush2.msra.mxu0 0.0
        %1412 = vmatprep.subr.mxu0 0.0
        %1413 = vmatpush2.msra.mxu0 0.0
        %1414 = vmatprep.subr.mxu0 0.0
        %1415 = vmatpush2.msra.mxu0 0.0
        %1416 = vmatprep.subr.mxu0 0.0
        %1417 = vmatpush2.msra.mxu0 0.0
        %1418 = vmatprep.subr.mxu0 0.0
        %1419 = vmatpush2.msra.mxu0 0.0
        %1420 = vmatprep.subr.mxu0 0.0
        %1421 = vmatpush2.msra.mxu0 0.0
        %1422 = vmatprep.subr.mxu0 0.0
        %1423 = vmatpush2.msra.mxu0 0.0
        %1424 = vmatprep.subr.mxu0 0.0
        %1425 = vmatpush2.msra.mxu0 0.0
        %1426 = vmatprep.subr.mxu0 0.0
        %1427 = vmatpush2.msra.mxu0 0.0
        %1428 = vmatprep.subr.mxu0 0.0
        %1429 = vmatpush2.msra.mxu0 0.0
        %1430 = vmatprep.subr.mxu0 0.0
        %1431 = vmatpush2.msra.mxu0 0.0
        %1432 = vmatprep.mubr.f32.mxu0 0.0
        %1433 = vmatmul.mubr.f32.gmra.mxu0 %v1176
        %v1434 = vpop.f32.mrf.mxu0
        %v1435 = vadd.f32 0.0, %v1434
        %v1436 = vpop.f32.mrf.mxu0
        %1437 = vmatprep.mubr.f32.mxu0 0.0
        %1438 = vmatmul.mubr.f32.gmra.mxu0 %v1179
        %v1439 = vpop.f32.mrf.mxu0
        %v1440 = vadd.f32 0.0, %v1439
        %v1441 = vpop.f32.mrf.mxu0
        %1442 = vmatprep.mubr.f32.mxu0 0.0
        %1443 = vmatmul.mubr.f32.gmra.mxu0 %v1182
        %v1444 = vpop.f32.mrf.mxu0
        %v1445 = vadd.f32 0.0, %v1444
        %v1446 = vpop.f32.mrf.mxu0
        %1447 = vmatprep.mubr.f32.mxu0 0.0
        %1448 = vmatmul.mubr.f32.gmra.mxu0 %v1185
        %v1449 = vpop.f32.mrf.mxu0
        %v1450 = vadd.f32 0.0, %v1449
        %v1451 = vpop.f32.mrf.mxu0
        %1452 = vmatprep.mubr.f32.mxu0 0.0
        %1453 = vmatmul.mubr.f32.gmra.mxu0 %v1188
        %v1454 = vpop.f32.mrf.mxu0
        %v1455 = vadd.f32 0.0, %v1454
        %v1456 = vpop.f32.mrf.mxu0
        %1457 = vmatprep.mubr.f32.mxu0 0.0
        %1458 = vmatmul.mubr.f32.gmra.mxu0 %v1191
        %v1459 = vpop.f32.mrf.mxu0
        %v1460 = vadd.f32 0.0, %v1459
        %v1461 = vpop.f32.mrf.mxu0
        %1462 = vmatprep.mubr.f32.mxu0 0.0
        %1463 = vmatmul.mubr.f32.gmra.mxu0 %v1194
        %v1464 = vpop.f32.mrf.mxu0
        %v1465 = vadd.f32 0.0, %v1464
        %v1466 = vpop.f32.mrf.mxu0
        %1467 = vmatprep.mubr.f32.mxu0 0.0
        %1468 = vmatmul.mubr.f32.gmra.mxu0 %v1197
        %v1469 = vpop.f32.mrf.mxu0
        %v1470 = vadd.f32 0.0, %v1469
        %v1471 = vpop.f32.mrf.mxu0
        %1472 = vmatprep.mubr.f32.mxu0 0.0
        %1473 = vmatmul.mubr.f32.gmra.mxu0 %v1200
        %v1474 = vpop.f32.mrf.mxu0
        %v1475 = vadd.f32 0.0, %v1474
        %v1476 = vpop.f32.mrf.mxu0
        %1477 = vmatprep.mubr.f32.mxu0 0.0
        %1478 = vmatmul.mubr.f32.gmra.mxu0 %v1203
        %v1479 = vpop.f32.mrf.mxu0
        %v1480 = vadd.f32 0.0, %v1479
        %v1481 = vpop.f32.mrf.mxu0
        %1482 = vmatprep.mubr.f32.mxu0 0.0
        %1483 = vmatmul.mubr.f32.gmra.mxu0 %v1206
        %v1484 = vpop.f32.mrf.mxu0
        %v1485 = vadd.f32 0.0, %v1484
        %v1486 = vpop.f32.mrf.mxu0
        %1487 = vmatprep.mubr.f32.mxu0 0.0
        %1488 = vmatmul.mubr.f32.gmra.mxu0 %v1209
        %v1489 = vpop.f32.mrf.mxu0
        %v1490 = vadd.f32 0.0, %v1489
        %v1491 = vpop.f32.mrf.mxu0
        %1492 = vmatprep.mubr.f32.mxu0 0.0
        %1493 = vmatmul.mubr.f32.gmra.mxu0 %v1212
        %v1494 = vpop.f32.mrf.mxu0
        %v1495 = vadd.f32 0.0, %v1494
        %v1496 = vpop.f32.mrf.mxu0
        %1497 = vmatprep.mubr.f32.mxu0 0.0
        %1498 = vmatmul.mubr.f32.gmra.mxu0 %v1215
        %v1499 = vpop.f32.mrf.mxu0
        %v1500 = vadd.f32 0.0, %v1499
        %v1501 = vpop.f32.mrf.mxu0
        %1502 = vmatprep.mubr.f32.mxu0 0.0
        %1503 = vmatmul.mubr.f32.gmra.mxu0 %v1218
        %v1504 = vpop.f32.mrf.mxu0
        %v1505 = vadd.f32 0.0, %v1504
        %v1506 = vpop.f32.mrf.mxu0
        %1507 = vmatprep.mubr.f32.mxu0 0.0
        %1508 = vmatmul.mubr.f32.gmra.mxu0 %v1221
        %v1509 = vpop.f32.mrf.mxu0
        %v1510 = vadd.f32 0.0, %v1509
        %v1511 = vpop.f32.mrf.mxu0
        %1512 = vdwg.mxu0
        %v1513 = vmul.f32 %v634, %v1290
        %v1514 = vmul.f32 %v639, %v1295
        %v1515 = vmul.f32 %v644, %v1300
        %v1516 = vmul.f32 %v649, %v1305
        %v1517 = vmul.f32 %v654, %v1310
        %v1518 = vmul.f32 %v659, %v1315
        %v1519 = vmul.f32 %v664, %v1320
        %v1520 = vmul.f32 %v669, %v1325
        %v1521 = vmul.f32 %v674, %v1330
        %v1522 = vmul.f32 %v679, %v1335
        %v1523 = vmul.f32 %v684, %v1340
        %v1524 = vmul.f32 %v689, %v1345
        %v1525 = vmul.f32 %v694, %v1350
        %v1526 = vmul.f32 %v699, %v1355
        %v1527 = vmul.f32 %v704, %v1360
        %v1528 = vmul.f32 %v709, %v1365
        %1529 = vmatprep.subr.mxu0 0.0
        %1530 = vmatpush1.msra.mxu0 %v1510
        %1531 = vmatprep.subr.mxu0 0.0
        %1532 = vmatpush1.msra.mxu0 %v1505
        %1533 = vmatprep.subr.mxu0 0.0
        %1534 = vmatpush1.msra.mxu0 %v1500
        %1535 = vmatprep.subr.mxu0 0.0
        %1536 = vmatpush1.msra.mxu0 %v1495
        %1537 = vmatprep.subr.mxu0 0.0
        %1538 = vmatpush1.msra.mxu0 %v1490
        %1539 = vmatprep.subr.mxu0 0.0
        %1540 = vmatpush1.msra.mxu0 %v1485
        %1541 = vmatprep.subr.mxu0 0.0
        %1542 = vmatpush1.msra.mxu0 %v1480
        %1543 = vmatprep.subr.mxu0 0.0
        %1544 = vmatpush1.msra.mxu0 %v1475
        %1545 = vmatprep.subr.mxu0 0.0
        %1546 = vmatpush1.msra.mxu0 %v1470
        %1547 = vmatprep.subr.mxu0 0.0
        %1548 = vmatpush1.msra.mxu0 %v1465
        %1549 = vmatprep.subr.mxu0 0.0
        %1550 = vmatpush1.msra.mxu0 %v1460
        %1551 = vmatprep.subr.mxu0 0.0
        %1552 = vmatpush1.msra.mxu0 %v1455
        %1553 = vmatprep.subr.mxu0 0.0
        %1554 = vmatpush1.msra.mxu0 %v1450
        %1555 = vmatprep.subr.mxu0 0.0
        %1556 = vmatpush1.msra.mxu0 %v1445
        %1557 = vmatprep.subr.mxu0 0.0
        %1558 = vmatpush1.msra.mxu0 %v1440
        %1559 = vmatprep.subr.mxu0 0.0
        %1560 = vmatpush1.msra.mxu0 %v1435
        %1561 = vmatprep.subr.mxu0 0.0
        %1562 = vmatpush2.msra.mxu0 0.0
        %1563 = vmatprep.subr.mxu0 0.0
        %1564 = vmatpush2.msra.mxu0 0.0
        %1565 = vmatprep.subr.mxu0 0.0
        %1566 = vmatpush2.msra.mxu0 0.0
        %1567 = vmatprep.subr.mxu0 0.0
        %1568 = vmatpush2.msra.mxu0 0.0
        %1569 = vmatprep.subr.mxu0 0.0
        %1570 = vmatpush2.msra.mxu0 0.0
        %1571 = vmatprep.subr.mxu0 0.0
        %1572 = vmatpush2.msra.mxu0 0.0
        %1573 = vmatprep.subr.mxu0 0.0
        %1574 = vmatpush2.msra.mxu0 0.0
        %1575 = vmatprep.subr.mxu0 0.0
        %1576 = vmatpush2.msra.mxu0 0.0
        %1577 = vmatprep.subr.mxu0 0.0
        %1578 = vmatpush2.msra.mxu0 0.0
        %1579 = vmatprep.subr.mxu0 0.0
        %1580 = vmatpush2.msra.mxu0 0.0
        %1581 = vmatprep.subr.mxu0 0.0
        %1582 = vmatpush2.msra.mxu0 0.0
        %1583 = vmatprep.subr.mxu0 0.0
        %1584 = vmatpush2.msra.mxu0 0.0
        %1585 = vmatprep.subr.mxu0 0.0
        %1586 = vmatpush2.msra.mxu0 0.0
        %1587 = vmatprep.subr.mxu0 0.0
        %1588 = vmatpush2.msra.mxu0 0.0
        %1589 = vmatprep.subr.mxu0 0.0
        %1590 = vmatpush2.msra.mxu0 0.0
        %1591 = vmatprep.subr.mxu0 0.0
        %1592 = vmatpush2.msra.mxu0 0.0
        %1593 = vmatprep.mubr.f32.mxu0 0.0
        %1594 = vmatmul.mubr.f32.gmra.mxu0 %v424
        %v1595 = vpop.f32.mrf.mxu0
        %v1596 = vadd.f32 0.0, %v1595
        %v1597 = vpop.f32.mrf.mxu0
        %1598 = vmatprep.mubr.f32.mxu0 0.0
        %1599 = vmatmul.mubr.f32.gmra.mxu0 %v425
        %v1600 = vpop.f32.mrf.mxu0
        %v1601 = vadd.f32 0.0, %v1600
        %v1602 = vpop.f32.mrf.mxu0
        %1603 = vmatprep.mubr.f32.mxu0 0.0
        %1604 = vmatmul.mubr.f32.gmra.mxu0 %v426
        %v1605 = vpop.f32.mrf.mxu0
        %v1606 = vadd.f32 0.0, %v1605
        %v1607 = vpop.f32.mrf.mxu0
        %1608 = vmatprep.mubr.f32.mxu0 0.0
        %1609 = vmatmul.mubr.f32.gmra.mxu0 %v427
        %v1610 = vpop.f32.mrf.mxu0
        %v1611 = vadd.f32 0.0, %v1610
        %v1612 = vpop.f32.mrf.mxu0
        %1613 = vmatprep.mubr.f32.mxu0 0.0
        %1614 = vmatmul.mubr.f32.gmra.mxu0 %v428
        %v1615 = vpop.f32.mrf.mxu0
        %v1616 = vadd.f32 0.0, %v1615
        %v1617 = vpop.f32.mrf.mxu0
        %1618 = vmatprep.mubr.f32.mxu0 0.0
        %1619 = vmatmul.mubr.f32.gmra.mxu0 %v429
        %v1620 = vpop.f32.mrf.mxu0
        %v1621 = vadd.f32 0.0, %v1620
        %v1622 = vpop.f32.mrf.mxu0
        %1623 = vmatprep.mubr.f32.mxu0 0.0
        %1624 = vmatmul.mubr.f32.gmra.mxu0 %v430
        %v1625 = vpop.f32.mrf.mxu0
        %v1626 = vadd.f32 0.0, %v1625
        %v1627 = vpop.f32.mrf.mxu0
        %1628 = vmatprep.mubr.f32.mxu0 0.0
        %1629 = vmatmul.mubr.f32.gmra.mxu0 %v431
        %v1630 = vpop.f32.mrf.mxu0
        %v1631 = vadd.f32 0.0, %v1630
        %v1632 = vpop.f32.mrf.mxu0
        %1633 = vmatprep.mubr.f32.mxu0 0.0
        %1634 = vmatmul.mubr.f32.gmra.mxu0 %v432
        %v1635 = vpop.f32.mrf.mxu0
        %v1636 = vadd.f32 0.0, %v1635
        %v1637 = vpop.f32.mrf.mxu0
        %1638 = vmatprep.mubr.f32.mxu0 0.0
        %1639 = vmatmul.mubr.f32.gmra.mxu0 %v433
        %v1640 = vpop.f32.mrf.mxu0
        %v1641 = vadd.f32 0.0, %v1640
        %v1642 = vpop.f32.mrf.mxu0
        %1643 = vmatprep.mubr.f32.mxu0 0.0
        %1644 = vmatmul.mubr.f32.gmra.mxu0 %v434
        %v1645 = vpop.f32.mrf.mxu0
        %v1646 = vadd.f32 0.0, %v1645
        %v1647 = vpop.f32.mrf.mxu0
        %1648 = vmatprep.mubr.f32.mxu0 0.0
        %1649 = vmatmul.mubr.f32.gmra.mxu0 %v435
        %v1650 = vpop.f32.mrf.mxu0
        %v1651 = vadd.f32 0.0, %v1650
        %v1652 = vpop.f32.mrf.mxu0
        %1653 = vmatprep.mubr.f32.mxu0 0.0
        %1654 = vmatmul.mubr.f32.gmra.mxu0 %v436
        %v1655 = vpop.f32.mrf.mxu0
        %v1656 = vadd.f32 0.0, %v1655
        %v1657 = vpop.f32.mrf.mxu0
        %1658 = vmatprep.mubr.f32.mxu0 0.0
        %1659 = vmatmul.mubr.f32.gmra.mxu0 %v437
        %v1660 = vpop.f32.mrf.mxu0
        %v1661 = vadd.f32 0.0, %v1660
        %v1662 = vpop.f32.mrf.mxu0
        %1663 = vmatprep.mubr.f32.mxu0 0.0
        %1664 = vmatmul.mubr.f32.gmra.mxu0 %v438
        %v1665 = vpop.f32.mrf.mxu0
        %v1666 = vadd.f32 0.0, %v1665
        %v1667 = vpop.f32.mrf.mxu0
        %1668 = vmatprep.mubr.f32.mxu0 0.0
        %1669 = vmatmul.mubr.f32.gmra.mxu0 %v439
        %v1670 = vpop.f32.mrf.mxu0
        %v1671 = vadd.f32 0.0, %v1670
        %v1672 = vpop.f32.mrf.mxu0
        %1673 = vdwg.mxu0
        %v1674 = vadd.f32 %v1513, %v1596
        %v1675 = vadd.f32 %v1514, %v1601
        %v1676 = vadd.f32 %v1515, %v1606
        %v1677 = vadd.f32 %v1516, %v1611
        %v1678 = vadd.f32 %v1517, %v1616
        %v1679 = vadd.f32 %v1518, %v1621
        %v1680 = vadd.f32 %v1519, %v1626
        %v1681 = vadd.f32 %v1520, %v1631
        %v1682 = vadd.f32 %v1521, %v1636
        %v1683 = vadd.f32 %v1522, %v1641
        %v1684 = vadd.f32 %v1523, %v1646
        %v1685 = vadd.f32 %v1524, %v1651
        %v1686 = vadd.f32 %v1525, %v1656
        %v1687 = vadd.f32 %v1526, %v1661
        %v1688 = vadd.f32 %v1527, %v1666
        %v1689 = vadd.f32 %v1528, %v1671
        %v1691 = vlaneseq
        %v1692 = vshrl.u32 %v1691, 7
        %v1693 = vsub.s32 0, %v1692
        %v1694 = vrot.slane %v466, %v1693
        %v1696 = vmul.f32 %v1674, %v1694
        %v1697 = vmul.f32 %v1675, %v1694
        %v1698 = vmul.f32 %v1676, %v1694
        %v1699 = vmul.f32 %v1677, %v1694
        %v1700 = vmul.f32 %v1678, %v1694
        %v1701 = vmul.f32 %v1679, %v1694
        %v1702 = vmul.f32 %v1680, %v1694
        %v1703 = vmul.f32 %v1681, %v1694
        %v1704 = vmul.f32 %v1682, %v1694
        %v1705 = vmul.f32 %v1683, %v1694
        %v1706 = vmul.f32 %v1684, %v1694
        %v1707 = vmul.f32 %v1685, %v1694
        %v1708 = vmul.f32 %v1686, %v1694
        %v1709 = vmul.f32 %v1687, %v1694
        %v1710 = vmul.f32 %v1688, %v1694
        %v1711 = vmul.f32 %v1689, %v1694
        %v1713 = vlaneseq
        %v1714 = vshrl.u32 %v1713, 7
        %v1715 = vsub.s32 0, %v1714
        %v1716 = vrot.slane %v467, %v1715
        %v1718 = vadd.f32 %v1696, %v1716
        %v1719 = vadd.f32 %v1697, %v1716
        %v1720 = vadd.f32 %v1698, %v1716
        %v1721 = vadd.f32 %v1699, %v1716
        %v1722 = vadd.f32 %v1700, %v1716
        %v1723 = vadd.f32 %v1701, %v1716
        %v1724 = vadd.f32 %v1702, %v1716
        %v1725 = vadd.f32 %v1703, %v1716
        %v1726 = vadd.f32 %v1704, %v1716
        %v1727 = vadd.f32 %v1705, %v1716
        %v1728 = vadd.f32 %v1706, %v1716
        %v1729 = vadd.f32 %v1707, %v1716
        %v1730 = vadd.f32 %v1708, %v1716
        %v1731 = vadd.f32 %v1709, %v1716
        %v1732 = vadd.f32 %v1710, %v1716
        %v1733 = vadd.f32 %v1711, %v1716
        %v1734 = vmax.f32 %v1718, 0.0
        %v1735 = vmax.f32 %v1719, 0.0
        %v1736 = vmax.f32 %v1720, 0.0
        %v1737 = vmax.f32 %v1721, 0.0
        %v1738 = vmax.f32 %v1722, 0.0
        %v1739 = vmax.f32 %v1723, 0.0
        %v1740 = vmax.f32 %v1724, 0.0
        %v1741 = vmax.f32 %v1725, 0.0
        %v1742 = vmax.f32 %v1726, 0.0
        %v1743 = vmax.f32 %v1727, 0.0
        %v1744 = vmax.f32 %v1728, 0.0
        %v1745 = vmax.f32 %v1729, 0.0
        %v1746 = vmax.f32 %v1730, 0.0
        %v1747 = vmax.f32 %v1731, 0.0
        %v1748 = vmax.f32 %v1732, 0.0
        %v1749 = vmax.f32 %v1733, 0.0
        %v1750 = vadd.f32 %v470, %v1734
        %v1751 = vadd.f32 %v471, %v1735
        %v1752 = vadd.f32 %v472, %v1736
        %v1753 = vadd.f32 %v473, %v1737
        %v1754 = vadd.f32 %v474, %v1738
        %v1755 = vadd.f32 %v475, %v1739
        %v1756 = vadd.f32 %v476, %v1740
        %v1757 = vadd.f32 %v477, %v1741
        %v1758 = vadd.f32 %v478, %v1742
        %v1759 = vadd.f32 %v479, %v1743
        %v1760 = vadd.f32 %v480, %v1744
        %v1761 = vadd.f32 %v481, %v1745
        %v1762 = vadd.f32 %v482, %v1746
        %v1763 = vadd.f32 %v483, %v1747
        %v1764 = vadd.f32 %v484, %v1748
        %v1765 = vadd.f32 %v485, %v1749
        %s1766 = scalar_lea.vmem %s405, %s468 [#allocation5]
        %1767 = vst.msk [vmem:[%s1766] sm:$0xff] %vm727, %v1750
        %1768 = vst.msk [vmem:[%s1766 + $0x8] sm:$0xff] %vm727, %v1751
        %1769 = vst.msk [vmem:[%s1766 + $0x10] sm:$0xff] %vm727, %v1752
        %1770 = vst.msk [vmem:[%s1766 + $0x18] sm:$0xff] %vm727, %v1753
        %1771 = vst.msk [vmem:[%s1766 + $0x20] sm:$0xff] %vm727, %v1754
        %1772 = vst.msk [vmem:[%s1766 + $0x28] sm:$0xff] %vm727, %v1755
        %1773 = vst.msk [vmem:[%s1766 + $0x30] sm:$0xff] %vm727, %v1756
        %1774 = vst.msk [vmem:[%s1766 + $0x38] sm:$0xff] %vm727, %v1757
        %1775 = vst.msk [vmem:[%s1766 + $0x40] sm:$0xff] %vm727, %v1758
        %1776 = vst.msk [vmem:[%s1766 + $0x48] sm:$0xff] %vm727, %v1759
        %1777 = vst.msk [vmem:[%s1766 + $0x50] sm:$0xff] %vm727, %v1760
        %1778 = vst.msk [vmem:[%s1766 + $0x58] sm:$0xff] %vm727, %v1761
        %1779 = vst.msk [vmem:[%s1766 + $0x60] sm:$0xff] %vm727, %v1762
        %1780 = vst.msk [vmem:[%s1766 + $0x68] sm:$0xff] %vm727, %v1763
        %1781 = vst.msk [vmem:[%s1766 + $0x70] sm:$0xff] %vm727, %v1764
        %1782 = vst.msk [vmem:[%s1766 + $0x78] sm:$0xff] %vm727, %v1765
        %s1783 = smul.u32 8, 16
        %s1784 = scalar_lea.vmem %s367, %s1783 [#allocation2]
        %v1785 = vld [vmem:[%s1784] sm:$0xff]
        %v1786 = vld [vmem:[%s1784 + $0x8] sm:$0xff]
        %v1787 = vld [vmem:[%s1784 + $0x10] sm:$0xff]
        %v1788 = vld [vmem:[%s1784 + $0x18] sm:$0xff]
        %v1789 = vld [vmem:[%s1784 + $0x20] sm:$0xff]
        %v1790 = vld [vmem:[%s1784 + $0x28] sm:$0xff]
        %v1791 = vld [vmem:[%s1784 + $0x30] sm:$0xff]
        %v1792 = vld [vmem:[%s1784 + $0x38] sm:$0xff]
        %v1793 = vld [vmem:[%s1784 + $0x40] sm:$0xff]
        %v1794 = vld [vmem:[%s1784 + $0x48] sm:$0xff]
        %v1795 = vld [vmem:[%s1784 + $0x50] sm:$0xff]
        %v1796 = vld [vmem:[%s1784 + $0x58] sm:$0xff]
        %v1797 = vld [vmem:[%s1784 + $0x60] sm:$0xff]
        %v1798 = vld [vmem:[%s1784 + $0x68] sm:$0xff]
        %v1799 = vld [vmem:[%s1784 + $0x70] sm:$0xff]
        %v1800 = vld [vmem:[%s1784 + $0x78] sm:$0xff]
        %1801 = vmatprep.subr.mxu0 0.0
        %1802 = vmatpush1.msra.mxu0 %v1800
        %1803 = vmatprep.subr.mxu0 0.0
        %1804 = vmatpush1.msra.mxu0 %v1799
        %1805 = vmatprep.subr.mxu0 0.0
        %1806 = vmatpush1.msra.mxu0 %v1798
        %1807 = vmatprep.subr.mxu0 0.0
        %1808 = vmatpush1.msra.mxu0 %v1797
        %1809 = vmatprep.subr.mxu0 0.0
        %1810 = vmatpush1.msra.mxu0 %v1796
        %1811 = vmatprep.subr.mxu0 0.0
        %1812 = vmatpush1.msra.mxu0 %v1795
        %1813 = vmatprep.subr.mxu0 0.0
        %1814 = vmatpush1.msra.mxu0 %v1794
        %1815 = vmatprep.subr.mxu0 0.0
        %1816 = vmatpush1.msra.mxu0 %v1793
        %1817 = vmatprep.subr.mxu0 0.0
        %1818 = vmatpush1.msra.mxu0 %v1792
        %1819 = vmatprep.subr.mxu0 0.0
        %1820 = vmatpush1.msra.mxu0 %v1791
        %1821 = vmatprep.subr.mxu0 0.0
        %1822 = vmatpush1.msra.mxu0 %v1790
        %1823 = vmatprep.subr.mxu0 0.0
        %1824 = vmatpush1.msra.mxu0 %v1789
        %1825 = vmatprep.subr.mxu0 0.0
        %1826 = vmatpush1.msra.mxu0 %v1788
        %1827 = vmatprep.subr.mxu0 0.0
        %1828 = vmatpush1.msra.mxu0 %v1787
        %1829 = vmatprep.subr.mxu0 0.0
        %1830 = vmatpush1.msra.mxu0 %v1786
        %1831 = vmatprep.subr.mxu0 0.0
        %1832 = vmatpush1.msra.mxu0 %v1785
        %1833 = vmatprep.subr.mxu0 0.0
        %1834 = vmatpush2.msra.mxu0 0.0
        %1835 = vmatprep.subr.mxu0 0.0
        %1836 = vmatpush2.msra.mxu0 0.0
        %1837 = vmatprep.subr.mxu0 0.0
        %1838 = vmatpush2.msra.mxu0 0.0
        %1839 = vmatprep.subr.mxu0 0.0
        %1840 = vmatpush2.msra.mxu0 0.0
        %1841 = vmatprep.subr.mxu0 0.0
        %1842 = vmatpush2.msra.mxu0 0.0
        %1843 = vmatprep.subr.mxu0 0.0
        %1844 = vmatpush2.msra.mxu0 0.0
        %1845 = vmatprep.subr.mxu0 0.0
        %1846 = vmatpush2.msra.mxu0 0.0
        %1847 = vmatprep.subr.mxu0 0.0
        %1848 = vmatpush2.msra.mxu0 0.0
        %1849 = vmatprep.subr.mxu0 0.0
        %1850 = vmatpush2.msra.mxu0 0.0
        %1851 = vmatprep.subr.mxu0 0.0
        %1852 = vmatpush2.msra.mxu0 0.0
        %1853 = vmatprep.subr.mxu0 0.0
        %1854 = vmatpush2.msra.mxu0 0.0
        %1855 = vmatprep.subr.mxu0 0.0
        %1856 = vmatpush2.msra.mxu0 0.0
        %1857 = vmatprep.subr.mxu0 0.0
        %1858 = vmatpush2.msra.mxu0 0.0
        %1859 = vmatprep.subr.mxu0 0.0
        %1860 = vmatpush2.msra.mxu0 0.0
        %1861 = vmatprep.subr.mxu0 0.0
        %1862 = vmatpush2.msra.mxu0 0.0
        %1863 = vmatprep.subr.mxu0 0.0
        %1864 = vmatpush2.msra.mxu0 0.0
        %1865 = vmatprep.mubr.f32.mxu0 0.0
        %1866 = vmatmul.mubr.f32.gmra.mxu0 %v424
        %v1867 = vpop.f32.mrf.mxu0
        %v1868 = vadd.f32 0.0, %v1867
        %v1869 = vpop.f32.mrf.mxu0
        %1870 = vmatprep.mubr.f32.mxu0 0.0
        %1871 = vmatmul.mubr.f32.gmra.mxu0 %v425
        %v1872 = vpop.f32.mrf.mxu0
        %v1873 = vadd.f32 0.0, %v1872
        %v1874 = vpop.f32.mrf.mxu0
        %1875 = vmatprep.mubr.f32.mxu0 0.0
        %1876 = vmatmul.mubr.f32.gmra.mxu0 %v426
        %v1877 = vpop.f32.mrf.mxu0
        %v1878 = vadd.f32 0.0, %v1877
        %v1879 = vpop.f32.mrf.mxu0
        %1880 = vmatprep.mubr.f32.mxu0 0.0
        %1881 = vmatmul.mubr.f32.gmra.mxu0 %v427
        %v1882 = vpop.f32.mrf.mxu0
        %v1883 = vadd.f32 0.0, %v1882
        %v1884 = vpop.f32.mrf.mxu0
        %1885 = vmatprep.mubr.f32.mxu0 0.0
        %1886 = vmatmul.mubr.f32.gmra.mxu0 %v428
        %v1887 = vpop.f32.mrf.mxu0
        %v1888 = vadd.f32 0.0, %v1887
        %v1889 = vpop.f32.mrf.mxu0
        %1890 = vmatprep.mubr.f32.mxu0 0.0
        %1891 = vmatmul.mubr.f32.gmra.mxu0 %v429
        %v1892 = vpop.f32.mrf.mxu0
        %v1893 = vadd.f32 0.0, %v1892
        %v1894 = vpop.f32.mrf.mxu0
        %1895 = vmatprep.mubr.f32.mxu0 0.0
        %1896 = vmatmul.mubr.f32.gmra.mxu0 %v430
        %v1897 = vpop.f32.mrf.mxu0
        %v1898 = vadd.f32 0.0, %v1897
        %v1899 = vpop.f32.mrf.mxu0
        %1900 = vmatprep.mubr.f32.mxu0 0.0
        %1901 = vmatmul.mubr.f32.gmra.mxu0 %v431
        %v1902 = vpop.f32.mrf.mxu0
        %v1903 = vadd.f32 0.0, %v1902
        %v1904 = vpop.f32.mrf.mxu0
        %1905 = vmatprep.mubr.f32.mxu0 0.0
        %1906 = vmatmul.mubr.f32.gmra.mxu0 %v432
        %v1907 = vpop.f32.mrf.mxu0
        %v1908 = vadd.f32 0.0, %v1907
        %v1909 = vpop.f32.mrf.mxu0
        %1910 = vmatprep.mubr.f32.mxu0 0.0
        %1911 = vmatmul.mubr.f32.gmra.mxu0 %v433
        %v1912 = vpop.f32.mrf.mxu0
        %v1913 = vadd.f32 0.0, %v1912
        %v1914 = vpop.f32.mrf.mxu0
        %1915 = vmatprep.mubr.f32.mxu0 0.0
        %1916 = vmatmul.mubr.f32.gmra.mxu0 %v434
        %v1917 = vpop.f32.mrf.mxu0
        %v1918 = vadd.f32 0.0, %v1917
        %v1919 = vpop.f32.mrf.mxu0
        %1920 = vmatprep.mubr.f32.mxu0 0.0
        %1921 = vmatmul.mubr.f32.gmra.mxu0 %v435
        %v1922 = vpop.f32.mrf.mxu0
        %v1923 = vadd.f32 0.0, %v1922
        %v1924 = vpop.f32.mrf.mxu0
        %1925 = vmatprep.mubr.f32.mxu0 0.0
        %1926 = vmatmul.mubr.f32.gmra.mxu0 %v436
        %v1927 = vpop.f32.mrf.mxu0
        %v1928 = vadd.f32 0.0, %v1927
        %v1929 = vpop.f32.mrf.mxu0
        %1930 = vmatprep.mubr.f32.mxu0 0.0
        %1931 = vmatmul.mubr.f32.gmra.mxu0 %v437
        %v1932 = vpop.f32.mrf.mxu0
        %v1933 = vadd.f32 0.0, %v1932
        %v1934 = vpop.f32.mrf.mxu0
        %1935 = vmatprep.mubr.f32.mxu0 0.0
        %1936 = vmatmul.mubr.f32.gmra.mxu0 %v438
        %v1937 = vpop.f32.mrf.mxu0
        %v1938 = vadd.f32 0.0, %v1937
        %v1939 = vpop.f32.mrf.mxu0
        %1940 = vmatprep.mubr.f32.mxu0 0.0
        %1941 = vmatmul.mubr.f32.gmra.mxu0 %v439
        %v1942 = vpop.f32.mrf.mxu0
        %v1943 = vadd.f32 0.0, %v1942
        %v1944 = vpop.f32.mrf.mxu0
        %1945 = vdwg.mxu0
        %v1946 = vmul.f32 %v634, %v1785
        %v1947 = vmul.f32 %v639, %v1786
        %v1948 = vmul.f32 %v644, %v1787
        %v1949 = vmul.f32 %v649, %v1788
        %v1950 = vmul.f32 %v654, %v1789
        %v1951 = vmul.f32 %v659, %v1790
        %v1952 = vmul.f32 %v664, %v1791
        %v1953 = vmul.f32 %v669, %v1792
        %v1954 = vmul.f32 %v674, %v1793
        %v1955 = vmul.f32 %v679, %v1794
        %v1956 = vmul.f32 %v684, %v1795
        %v1957 = vmul.f32 %v689, %v1796
        %v1958 = vmul.f32 %v694, %v1797
        %v1959 = vmul.f32 %v699, %v1798
        %v1960 = vmul.f32 %v704, %v1799
        %v1961 = vmul.f32 %v709, %v1800
        %v1963 = vsel %vm727, %v1868, 0
        %v1966 = vsel %vm727, %v1873, 0
        %v1969 = vsel %vm727, %v1878, 0
        %v1972 = vsel %vm727, %v1883, 0
        %v1975 = vsel %vm727, %v1888, 0
        %v1978 = vsel %vm727, %v1893, 0
        %v1981 = vsel %vm727, %v1898, 0
        %v1984 = vsel %vm727, %v1903, 0
        %v1987 = vsel %vm727, %v1908, 0
        %v1990 = vsel %vm727, %v1913, 0
        %v1993 = vsel %vm727, %v1918, 0
        %v1996 = vsel %vm727, %v1923, 0
        %v1999 = vsel %vm727, %v1928, 0
        %v2002 = vsel %vm727, %v1933, 0
        %v2005 = vsel %vm727, %v1938, 0
        %v2008 = vsel %vm727, %v1943, 0
        %2010 = vmatprep.subr.mxu0 0.0
        %2011 = vmatpush1.msra.mxu0 0.0
        %2012 = vmatprep.subr.mxu0 0.0
        %2013 = vmatpush1.msra.mxu0 0.0
        %2014 = vmatprep.subr.mxu0 0.0
        %2015 = vmatpush1.msra.mxu0 0.0
        %2016 = vmatprep.subr.mxu0 0.0
        %2017 = vmatpush1.msra.mxu0 0.0
        %2018 = vmatprep.subr.mxu0 0.0
        %2019 = vmatpush1.msra.mxu0 0.0
        %2020 = vmatprep.subr.mxu0 0.0
        %2021 = vmatpush1.msra.mxu0 0.0
        %2022 = vmatprep.subr.mxu0 0.0
        %2023 = vmatpush1.msra.mxu0 0.0
        %2024 = vmatprep.subr.mxu0 0.0
        %2025 = vmatpush1.msra.mxu0 0.0
        %2026 = vmatprep.subr.mxu0 0.0
        %2027 = vmatpush1.msra.mxu0 0.0
        %2028 = vmatprep.subr.mxu0 0.0
        %2029 = vmatpush1.msra.mxu0 0.0
        %2030 = vmatprep.subr.mxu0 0.0
        %2031 = vmatpush1.msra.mxu0 0.0
        %2032 = vmatprep.subr.mxu0 0.0
        %2033 = vmatpush1.msra.mxu0 0.0
        %2034 = vmatprep.subr.mxu0 0.0
        %2035 = vmatpush1.msra.mxu0 %v447
        %2036 = vmatprep.subr.mxu0 0.0
        %2037 = vmatpush1.msra.mxu0 %v446
        %2038 = vmatprep.subr.mxu0 0.0
        %2039 = vmatpush1.msra.mxu0 %v445
        %2040 = vmatprep.subr.mxu0 0.0
        %2041 = vmatpush1.msra.mxu0 %v444
        %2042 = vmatprep.subr.mxu0 0.0
        %2043 = vmatpush2.msra.mxu0 0.0
        %2044 = vmatprep.subr.mxu0 0.0
        %2045 = vmatpush2.msra.mxu0 0.0
        %2046 = vmatprep.subr.mxu0 0.0
        %2047 = vmatpush2.msra.mxu0 0.0
        %2048 = vmatprep.subr.mxu0 0.0
        %2049 = vmatpush2.msra.mxu0 0.0
        %2050 = vmatprep.subr.mxu0 0.0
        %2051 = vmatpush2.msra.mxu0 0.0
        %2052 = vmatprep.subr.mxu0 0.0
        %2053 = vmatpush2.msra.mxu0 0.0
        %2054 = vmatprep.subr.mxu0 0.0
        %2055 = vmatpush2.msra.mxu0 0.0
        %2056 = vmatprep.subr.mxu0 0.0
        %2057 = vmatpush2.msra.mxu0 0.0
        %2058 = vmatprep.subr.mxu0 0.0
        %2059 = vmatpush2.msra.mxu0 0.0
        %2060 = vmatprep.subr.mxu0 0.0
        %2061 = vmatpush2.msra.mxu0 0.0
        %2062 = vmatprep.subr.mxu0 0.0
        %2063 = vmatpush2.msra.mxu0 0.0
        %2064 = vmatprep.subr.mxu0 0.0
        %2065 = vmatpush2.msra.mxu0 0.0
        %2066 = vmatprep.subr.mxu0 0.0
        %2067 = vmatpush2.msra.mxu0 0.0
        %2068 = vmatprep.subr.mxu0 0.0
        %2069 = vmatpush2.msra.mxu0 0.0
        %2070 = vmatprep.subr.mxu0 0.0
        %2071 = vmatpush2.msra.mxu0 0.0
        %2072 = vmatprep.subr.mxu0 0.0
        %2073 = vmatpush2.msra.mxu0 0.0
        %2074 = vmatprep.mubr.f32.mxu0 0.0
        %2075 = vmatmul.mubr.f32.gmra.mxu0 %v1963
        %v2076 = vpop.f32.mrf.mxu0
        %v2077 = vadd.f32 0.0, %v2076
        %v2078 = vpop.f32.mrf.mxu0
        %2079 = vmatprep.mubr.f32.mxu0 0.0
        %2080 = vmatmul.mubr.f32.gmra.mxu0 %v1966
        %v2081 = vpop.f32.mrf.mxu0
        %v2082 = vadd.f32 0.0, %v2081
        %v2083 = vpop.f32.mrf.mxu0
        %2084 = vmatprep.mubr.f32.mxu0 0.0
        %2085 = vmatmul.mubr.f32.gmra.mxu0 %v1969
        %v2086 = vpop.f32.mrf.mxu0
        %v2087 = vadd.f32 0.0, %v2086
        %v2088 = vpop.f32.mrf.mxu0
        %2089 = vmatprep.mubr.f32.mxu0 0.0
        %2090 = vmatmul.mubr.f32.gmra.mxu0 %v1972
        %v2091 = vpop.f32.mrf.mxu0
        %v2092 = vadd.f32 0.0, %v2091
        %v2093 = vpop.f32.mrf.mxu0
        %2094 = vmatprep.mubr.f32.mxu0 0.0
        %2095 = vmatmul.mubr.f32.gmra.mxu0 %v1975
        %v2096 = vpop.f32.mrf.mxu0
        %v2097 = vadd.f32 0.0, %v2096
        %v2098 = vpop.f32.mrf.mxu0
        %2099 = vmatprep.mubr.f32.mxu0 0.0
        %2100 = vmatmul.mubr.f32.gmra.mxu0 %v1978
        %v2101 = vpop.f32.mrf.mxu0
        %v2102 = vadd.f32 0.0, %v2101
        %v2103 = vpop.f32.mrf.mxu0
        %2104 = vmatprep.mubr.f32.mxu0 0.0
        %2105 = vmatmul.mubr.f32.gmra.mxu0 %v1981
        %v2106 = vpop.f32.mrf.mxu0
        %v2107 = vadd.f32 0.0, %v2106
        %v2108 = vpop.f32.mrf.mxu0
        %2109 = vmatprep.mubr.f32.mxu0 0.0
        %2110 = vmatmul.mubr.f32.gmra.mxu0 %v1984
        %v2111 = vpop.f32.mrf.mxu0
        %v2112 = vadd.f32 0.0, %v2111
        %v2113 = vpop.f32.mrf.mxu0
        %2114 = vmatprep.mubr.f32.mxu0 0.0
        %2115 = vmatmul.mubr.f32.gmra.mxu0 %v1987
        %v2116 = vpop.f32.mrf.mxu0
        %v2117 = vadd.f32 0.0, %v2116
        %v2118 = vpop.f32.mrf.mxu0
        %2119 = vmatprep.mubr.f32.mxu0 0.0
        %2120 = vmatmul.mubr.f32.gmra.mxu0 %v1990
        %v2121 = vpop.f32.mrf.mxu0
        %v2122 = vadd.f32 0.0, %v2121
        %v2123 = vpop.f32.mrf.mxu0
        %2124 = vmatprep.mubr.f32.mxu0 0.0
        %2125 = vmatmul.mubr.f32.gmra.mxu0 %v1993
        %v2126 = vpop.f32.mrf.mxu0
        %v2127 = vadd.f32 0.0, %v2126
        %v2128 = vpop.f32.mrf.mxu0
        %2129 = vmatprep.mubr.f32.mxu0 0.0
        %2130 = vmatmul.mubr.f32.gmra.mxu0 %v1996
        %v2131 = vpop.f32.mrf.mxu0
        %v2132 = vadd.f32 0.0, %v2131
        %v2133 = vpop.f32.mrf.mxu0
        %2134 = vmatprep.mubr.f32.mxu0 0.0
        %2135 = vmatmul.mubr.f32.gmra.mxu0 %v1999
        %v2136 = vpop.f32.mrf.mxu0
        %v2137 = vadd.f32 0.0, %v2136
        %v2138 = vpop.f32.mrf.mxu0
        %2139 = vmatprep.mubr.f32.mxu0 0.0
        %2140 = vmatmul.mubr.f32.gmra.mxu0 %v2002
        %v2141 = vpop.f32.mrf.mxu0
        %v2142 = vadd.f32 0.0, %v2141
        %v2143 = vpop.f32.mrf.mxu0
        %2144 = vmatprep.mubr.f32.mxu0 0.0
        %2145 = vmatmul.mubr.f32.gmra.mxu0 %v2005
        %v2146 = vpop.f32.mrf.mxu0
        %v2147 = vadd.f32 0.0, %v2146
        %v2148 = vpop.f32.mrf.mxu0
        %2149 = vmatprep.mubr.f32.mxu0 0.0
        %2150 = vmatmul.mubr.f32.gmra.mxu0 %v2008
        %v2151 = vpop.f32.mrf.mxu0
        %v2152 = vadd.f32 0.0, %v2151
        %v2153 = vpop.f32.mrf.mxu0
        %2154 = vdwg.mxu0
        %v2156 = vsel %vm727, %v1946, 0
        %v2159 = vsel %vm727, %v1947, 0
        %v2162 = vsel %vm727, %v1948, 0
        %v2165 = vsel %vm727, %v1949, 0
        %v2168 = vsel %vm727, %v1950, 0
        %v2171 = vsel %vm727, %v1951, 0
        %v2174 = vsel %vm727, %v1952, 0
        %v2177 = vsel %vm727, %v1953, 0
        %v2180 = vsel %vm727, %v1954, 0
        %v2183 = vsel %vm727, %v1955, 0
        %v2186 = vsel %vm727, %v1956, 0
        %v2189 = vsel %vm727, %v1957, 0
        %v2192 = vsel %vm727, %v1958, 0
        %v2195 = vsel %vm727, %v1959, 0
        %v2198 = vsel %vm727, %v1960, 0
        %v2201 = vsel %vm727, %v1961, 0
        %2203 = vmatprep.subr.mxu0 0.0
        %2204 = vmatpush1.msra.mxu0 0.0
        %2205 = vmatprep.subr.mxu0 0.0
        %2206 = vmatpush1.msra.mxu0 0.0
        %2207 = vmatprep.subr.mxu0 0.0
        %2208 = vmatpush1.msra.mxu0 0.0
        %2209 = vmatprep.subr.mxu0 0.0
        %2210 = vmatpush1.msra.mxu0 0.0
        %2211 = vmatprep.subr.mxu0 0.0
        %2212 = vmatpush1.msra.mxu0 0.0
        %2213 = vmatprep.subr.mxu0 0.0
        %2214 = vmatpush1.msra.mxu0 0.0
        %2215 = vmatprep.subr.mxu0 0.0
        %2216 = vmatpush1.msra.mxu0 0.0
        %2217 = vmatprep.subr.mxu0 0.0
        %2218 = vmatpush1.msra.mxu0 0.0
        %2219 = vmatprep.subr.mxu0 0.0
        %2220 = vmatpush1.msra.mxu0 0.0
        %2221 = vmatprep.subr.mxu0 0.0
        %2222 = vmatpush1.msra.mxu0 0.0
        %2223 = vmatprep.subr.mxu0 0.0
        %2224 = vmatpush1.msra.mxu0 0.0
        %2225 = vmatprep.subr.mxu0 0.0
        %2226 = vmatpush1.msra.mxu0 0.0
        %2227 = vmatprep.subr.mxu0 0.0
        %2228 = vmatpush1.msra.mxu0 %v443
        %2229 = vmatprep.subr.mxu0 0.0
        %2230 = vmatpush1.msra.mxu0 %v442
        %2231 = vmatprep.subr.mxu0 0.0
        %2232 = vmatpush1.msra.mxu0 %v441
        %2233 = vmatprep.subr.mxu0 0.0
        %2234 = vmatpush1.msra.mxu0 %v440
        %2235 = vmatprep.subr.mxu0 0.0
        %2236 = vmatpush2.msra.mxu0 0.0
        %2237 = vmatprep.subr.mxu0 0.0
        %2238 = vmatpush2.msra.mxu0 0.0
        %2239 = vmatprep.subr.mxu0 0.0
        %2240 = vmatpush2.msra.mxu0 0.0
        %2241 = vmatprep.subr.mxu0 0.0
        %2242 = vmatpush2.msra.mxu0 0.0
        %2243 = vmatprep.subr.mxu0 0.0
        %2244 = vmatpush2.msra.mxu0 0.0
        %2245 = vmatprep.subr.mxu0 0.0
        %2246 = vmatpush2.msra.mxu0 0.0
        %2247 = vmatprep.subr.mxu0 0.0
        %2248 = vmatpush2.msra.mxu0 0.0
        %2249 = vmatprep.subr.mxu0 0.0
        %2250 = vmatpush2.msra.mxu0 0.0
        %2251 = vmatprep.subr.mxu0 0.0
        %2252 = vmatpush2.msra.mxu0 0.0
        %2253 = vmatprep.subr.mxu0 0.0
        %2254 = vmatpush2.msra.mxu0 0.0
        %2255 = vmatprep.subr.mxu0 0.0
        %2256 = vmatpush2.msra.mxu0 0.0
        %2257 = vmatprep.subr.mxu0 0.0
        %2258 = vmatpush2.msra.mxu0 0.0
        %2259 = vmatprep.subr.mxu0 0.0
        %2260 = vmatpush2.msra.mxu0 0.0
        %2261 = vmatprep.subr.mxu0 0.0
        %2262 = vmatpush2.msra.mxu0 0.0
        %2263 = vmatprep.subr.mxu0 0.0
        %2264 = vmatpush2.msra.mxu0 0.0
        %2265 = vmatprep.subr.mxu0 0.0
        %2266 = vmatpush2.msra.mxu0 0.0
        %2267 = vmatprep.mubr.f32.mxu0 0.0
        %2268 = vmatmul.mubr.f32.gmra.mxu0 %v2156
        %v2269 = vpop.f32.mrf.mxu0
        %v2270 = vadd.f32 %v2077, %v2269
        %v2271 = vpop.f32.mrf.mxu0
        %2272 = vmatprep.mubr.f32.mxu0 0.0
        %2273 = vmatmul.mubr.f32.gmra.mxu0 %v2159
        %v2274 = vpop.f32.mrf.mxu0
        %v2275 = vadd.f32 %v2082, %v2274
        %v2276 = vpop.f32.mrf.mxu0
        %2277 = vmatprep.mubr.f32.mxu0 0.0
        %2278 = vmatmul.mubr.f32.gmra.mxu0 %v2162
        %v2279 = vpop.f32.mrf.mxu0
        %v2280 = vadd.f32 %v2087, %v2279
        %v2281 = vpop.f32.mrf.mxu0
        %2282 = vmatprep.mubr.f32.mxu0 0.0
        %2283 = vmatmul.mubr.f32.gmra.mxu0 %v2165
        %v2284 = vpop.f32.mrf.mxu0
        %v2285 = vadd.f32 %v2092, %v2284
        %v2286 = vpop.f32.mrf.mxu0
        %2287 = vmatprep.mubr.f32.mxu0 0.0
        %2288 = vmatmul.mubr.f32.gmra.mxu0 %v2168
        %v2289 = vpop.f32.mrf.mxu0
        %v2290 = vadd.f32 %v2097, %v2289
        %v2291 = vpop.f32.mrf.mxu0
        %2292 = vmatprep.mubr.f32.mxu0 0.0
        %2293 = vmatmul.mubr.f32.gmra.mxu0 %v2171
        %v2294 = vpop.f32.mrf.mxu0
        %v2295 = vadd.f32 %v2102, %v2294
        %v2296 = vpop.f32.mrf.mxu0
        %2297 = vmatprep.mubr.f32.mxu0 0.0
        %2298 = vmatmul.mubr.f32.gmra.mxu0 %v2174
        %v2299 = vpop.f32.mrf.mxu0
        %v2300 = vadd.f32 %v2107, %v2299
        %v2301 = vpop.f32.mrf.mxu0
        %2302 = vmatprep.mubr.f32.mxu0 0.0
        %2303 = vmatmul.mubr.f32.gmra.mxu0 %v2177
        %v2304 = vpop.f32.mrf.mxu0
        %v2305 = vadd.f32 %v2112, %v2304
        %v2306 = vpop.f32.mrf.mxu0
        %2307 = vmatprep.mubr.f32.mxu0 0.0
        %2308 = vmatmul.mubr.f32.gmra.mxu0 %v2180
        %v2309 = vpop.f32.mrf.mxu0
        %v2310 = vadd.f32 %v2117, %v2309
        %v2311 = vpop.f32.mrf.mxu0
        %2312 = vmatprep.mubr.f32.mxu0 0.0
        %2313 = vmatmul.mubr.f32.gmra.mxu0 %v2183
        %v2314 = vpop.f32.mrf.mxu0
        %v2315 = vadd.f32 %v2122, %v2314
        %v2316 = vpop.f32.mrf.mxu0
        %2317 = vmatprep.mubr.f32.mxu0 0.0
        %2318 = vmatmul.mubr.f32.gmra.mxu0 %v2186
        %v2319 = vpop.f32.mrf.mxu0
        %v2320 = vadd.f32 %v2127, %v2319
        %v2321 = vpop.f32.mrf.mxu0
        %2322 = vmatprep.mubr.f32.mxu0 0.0
        %2323 = vmatmul.mubr.f32.gmra.mxu0 %v2189
        %v2324 = vpop.f32.mrf.mxu0
        %v2325 = vadd.f32 %v2132, %v2324
        %v2326 = vpop.f32.mrf.mxu0
        %2327 = vmatprep.mubr.f32.mxu0 0.0
        %2328 = vmatmul.mubr.f32.gmra.mxu0 %v2192
        %v2329 = vpop.f32.mrf.mxu0
        %v2330 = vadd.f32 %v2137, %v2329
        %v2331 = vpop.f32.mrf.mxu0
        %2332 = vmatprep.mubr.f32.mxu0 0.0
        %2333 = vmatmul.mubr.f32.gmra.mxu0 %v2195
        %v2334 = vpop.f32.mrf.mxu0
        %v2335 = vadd.f32 %v2142, %v2334
        %v2336 = vpop.f32.mrf.mxu0
        %2337 = vmatprep.mubr.f32.mxu0 0.0
        %2338 = vmatmul.mubr.f32.gmra.mxu0 %v2198
        %v2339 = vpop.f32.mrf.mxu0
        %v2340 = vadd.f32 %v2147, %v2339
        %v2341 = vpop.f32.mrf.mxu0
        %2342 = vmatprep.mubr.f32.mxu0 0.0
        %2343 = vmatmul.mubr.f32.gmra.mxu0 %v2201
        %v2344 = vpop.f32.mrf.mxu0
        %v2345 = vadd.f32 %v2152, %v2344
        %v2346 = vpop.f32.mrf.mxu0
        %2347 = vdwg.mxu0
        %v2348 = vmul.f32 %v2270, %v1118
        %v2349 = vmul.f32 %v2275, %v1118
        %v2350 = vmul.f32 %v2280, %v1118
        %v2351 = vmul.f32 %v2285, %v1118
        %v2352 = vmul.f32 %v2290, %v1118
        %v2353 = vmul.f32 %v2295, %v1118
        %v2354 = vmul.f32 %v2300, %v1118
        %v2355 = vmul.f32 %v2305, %v1118
        %v2356 = vmul.f32 %v2310, %v1118
        %v2357 = vmul.f32 %v2315, %v1118
        %v2358 = vmul.f32 %v2320, %v1118
        %v2359 = vmul.f32 %v2325, %v1118
        %v2360 = vmul.f32 %v2330, %v1118
        %v2361 = vmul.f32 %v2335, %v1118
        %v2362 = vmul.f32 %v2340, %v1118
        %v2363 = vmul.f32 %v2345, %v1118
        %v2364 = vadd.f32 %v2348, %v1140
        %v2365 = vadd.f32 %v2349, %v1140
        %v2366 = vadd.f32 %v2350, %v1140
        %v2367 = vadd.f32 %v2351, %v1140
        %v2368 = vadd.f32 %v2352, %v1140
        %v2369 = vadd.f32 %v2353, %v1140
        %v2370 = vadd.f32 %v2354, %v1140
        %v2371 = vadd.f32 %v2355, %v1140
        %v2372 = vadd.f32 %v2356, %v1140
        %v2373 = vadd.f32 %v2357, %v1140
        %v2374 = vadd.f32 %v2358, %v1140
        %v2375 = vadd.f32 %v2359, %v1140
        %v2376 = vadd.f32 %v2360, %v1140
        %v2377 = vadd.f32 %v2361, %v1140
        %v2378 = vadd.f32 %v2362, %v1140
        %v2379 = vadd.f32 %v2363, %v1140
        %v2380 = vmax.f32 %v2364, 0.0
        %v2381 = vmax.f32 %v2365, 0.0
        %v2382 = vmax.f32 %v2366, 0.0
        %v2383 = vmax.f32 %v2367, 0.0
        %v2384 = vmax.f32 %v2368, 0.0
        %v2385 = vmax.f32 %v2369, 0.0
        %v2386 = vmax.f32 %v2370, 0.0
        %v2387 = vmax.f32 %v2371, 0.0
        %v2388 = vmax.f32 %v2372, 0.0
        %v2389 = vmax.f32 %v2373, 0.0
        %v2390 = vmax.f32 %v2374, 0.0
        %v2391 = vmax.f32 %v2375, 0.0
        %v2392 = vmax.f32 %v2376, 0.0
        %v2393 = vmax.f32 %v2377, 0.0
        %v2394 = vmax.f32 %v2378, 0.0
        %v2395 = vmax.f32 %v2379, 0.0
        %v2397 = vsel %vm1174, %v2380, 0
        %v2400 = vsel %vm1174, %v2381, 0
        %v2403 = vsel %vm1174, %v2382, 0
        %v2406 = vsel %vm1174, %v2383, 0
        %v2409 = vsel %vm1174, %v2384, 0
        %v2412 = vsel %vm1174, %v2385, 0
        %v2415 = vsel %vm1174, %v2386, 0
        %v2418 = vsel %vm1174, %v2387, 0
        %v2421 = vsel %vm1174, %v2388, 0
        %v2424 = vsel %vm1174, %v2389, 0
        %v2427 = vsel %vm1174, %v2390, 0
        %v2430 = vsel %vm1174, %v2391, 0
        %v2433 = vsel %vm1174, %v2392, 0
        %v2436 = vsel %vm1174, %v2393, 0
        %v2439 = vsel %vm1174, %v2394, 0
        %v2442 = vsel %vm1174, %v2395, 0
        %2444 = vmatprep.subr.mxu0 0.0
        %2445 = vmatpush1.msra.mxu0 0.0
        %2446 = vmatprep.subr.mxu0 0.0
        %2447 = vmatpush1.msra.mxu0 0.0
        %2448 = vmatprep.subr.mxu0 0.0
        %2449 = vmatpush1.msra.mxu0 0.0
        %2450 = vmatprep.subr.mxu0 0.0
        %2451 = vmatpush1.msra.mxu0 0.0
        %2452 = vmatprep.subr.mxu0 0.0
        %2453 = vmatpush1.msra.mxu0 0.0
        %2454 = vmatprep.subr.mxu0 0.0
        %2455 = vmatpush1.msra.mxu0 0.0
        %2456 = vmatprep.subr.mxu0 0.0
        %2457 = vmatpush1.msra.mxu0 0.0
        %2458 = vmatprep.subr.mxu0 0.0
        %2459 = vmatpush1.msra.mxu0 0.0
        %2460 = vmatprep.subr.mxu0 0.0
        %2461 = vmatpush1.msra.mxu0 %v457
        %2462 = vmatprep.subr.mxu0 0.0
        %2463 = vmatpush1.msra.mxu0 %v456
        %2464 = vmatprep.subr.mxu0 0.0
        %2465 = vmatpush1.msra.mxu0 %v455
        %2466 = vmatprep.subr.mxu0 0.0
        %2467 = vmatpush1.msra.mxu0 %v454
        %2468 = vmatprep.subr.mxu0 0.0
        %2469 = vmatpush1.msra.mxu0 %v453
        %2470 = vmatprep.subr.mxu0 0.0
        %2471 = vmatpush1.msra.mxu0 %v452
        %2472 = vmatprep.subr.mxu0 0.0
        %2473 = vmatpush1.msra.mxu0 %v451
        %2474 = vmatprep.subr.mxu0 0.0
        %2475 = vmatpush1.msra.mxu0 %v450
        %2476 = vmatprep.subr.mxu0 0.0
        %2477 = vmatpush2.msra.mxu0 0.0
        %2478 = vmatprep.subr.mxu0 0.0
        %2479 = vmatpush2.msra.mxu0 0.0
        %2480 = vmatprep.subr.mxu0 0.0
        %2481 = vmatpush2.msra.mxu0 0.0
        %2482 = vmatprep.subr.mxu0 0.0
        %2483 = vmatpush2.msra.mxu0 0.0
        %2484 = vmatprep.subr.mxu0 0.0
        %2485 = vmatpush2.msra.mxu0 0.0
        %2486 = vmatprep.subr.mxu0 0.0
        %2487 = vmatpush2.msra.mxu0 0.0
        %2488 = vmatprep.subr.mxu0 0.0
        %2489 = vmatpush2.msra.mxu0 0.0
        %2490 = vmatprep.subr.mxu0 0.0
        %2491 = vmatpush2.msra.mxu0 0.0
        %2492 = vmatprep.subr.mxu0 0.0
        %2493 = vmatpush2.msra.mxu0 0.0
        %2494 = vmatprep.subr.mxu0 0.0
        %2495 = vmatpush2.msra.mxu0 0.0
        %2496 = vmatprep.subr.mxu0 0.0
        %2497 = vmatpush2.msra.mxu0 0.0
        %2498 = vmatprep.subr.mxu0 0.0
        %2499 = vmatpush2.msra.mxu0 0.0
        %2500 = vmatprep.subr.mxu0 0.0
        %2501 = vmatpush2.msra.mxu0 0.0
        %2502 = vmatprep.subr.mxu0 0.0
        %2503 = vmatpush2.msra.mxu0 0.0
        %2504 = vmatprep.subr.mxu0 0.0
        %2505 = vmatpush2.msra.mxu0 0.0
        %2506 = vmatprep.subr.mxu0 0.0
        %2507 = vmatpush2.msra.mxu0 0.0
        %2508 = vmatprep.mubr.f32.mxu0 0.0
        %2509 = vmatmul.mubr.f32.gmra.mxu0 %v2397
        %v2510 = vpop.f32.mrf.mxu0
        %v2511 = vadd.f32 0.0, %v2510
        %v2512 = vpop.f32.mrf.mxu0
        %2513 = vmatprep.mubr.f32.mxu0 0.0
        %2514 = vmatmul.mubr.f32.gmra.mxu0 %v2400
        %v2515 = vpop.f32.mrf.mxu0
        %v2516 = vadd.f32 0.0, %v2515
        %v2517 = vpop.f32.mrf.mxu0
        %2518 = vmatprep.mubr.f32.mxu0 0.0
        %2519 = vmatmul.mubr.f32.gmra.mxu0 %v2403
        %v2520 = vpop.f32.mrf.mxu0
        %v2521 = vadd.f32 0.0, %v2520
        %v2522 = vpop.f32.mrf.mxu0
        %2523 = vmatprep.mubr.f32.mxu0 0.0
        %2524 = vmatmul.mubr.f32.gmra.mxu0 %v2406
        %v2525 = vpop.f32.mrf.mxu0
        %v2526 = vadd.f32 0.0, %v2525
        %v2527 = vpop.f32.mrf.mxu0
        %2528 = vmatprep.mubr.f32.mxu0 0.0
        %2529 = vmatmul.mubr.f32.gmra.mxu0 %v2409
        %v2530 = vpop.f32.mrf.mxu0
        %v2531 = vadd.f32 0.0, %v2530
        %v2532 = vpop.f32.mrf.mxu0
        %2533 = vmatprep.mubr.f32.mxu0 0.0
        %2534 = vmatmul.mubr.f32.gmra.mxu0 %v2412
        %v2535 = vpop.f32.mrf.mxu0
        %v2536 = vadd.f32 0.0, %v2535
        %v2537 = vpop.f32.mrf.mxu0
        %2538 = vmatprep.mubr.f32.mxu0 0.0
        %2539 = vmatmul.mubr.f32.gmra.mxu0 %v2415
        %v2540 = vpop.f32.mrf.mxu0
        %v2541 = vadd.f32 0.0, %v2540
        %v2542 = vpop.f32.mrf.mxu0
        %2543 = vmatprep.mubr.f32.mxu0 0.0
        %2544 = vmatmul.mubr.f32.gmra.mxu0 %v2418
        %v2545 = vpop.f32.mrf.mxu0
        %v2546 = vadd.f32 0.0, %v2545
        %v2547 = vpop.f32.mrf.mxu0
        %2548 = vmatprep.mubr.f32.mxu0 0.0
        %2549 = vmatmul.mubr.f32.gmra.mxu0 %v2421
        %v2550 = vpop.f32.mrf.mxu0
        %v2551 = vadd.f32 0.0, %v2550
        %v2552 = vpop.f32.mrf.mxu0
        %2553 = vmatprep.mubr.f32.mxu0 0.0
        %2554 = vmatmul.mubr.f32.gmra.mxu0 %v2424
        %v2555 = vpop.f32.mrf.mxu0
        %v2556 = vadd.f32 0.0, %v2555
        %v2557 = vpop.f32.mrf.mxu0
        %2558 = vmatprep.mubr.f32.mxu0 0.0
        %2559 = vmatmul.mubr.f32.gmra.mxu0 %v2427
        %v2560 = vpop.f32.mrf.mxu0
        %v2561 = vadd.f32 0.0, %v2560
        %v2562 = vpop.f32.mrf.mxu0
        %2563 = vmatprep.mubr.f32.mxu0 0.0
        %2564 = vmatmul.mubr.f32.gmra.mxu0 %v2430
        %v2565 = vpop.f32.mrf.mxu0
        %v2566 = vadd.f32 0.0, %v2565
        %v2567 = vpop.f32.mrf.mxu0
        %2568 = vmatprep.mubr.f32.mxu0 0.0
        %2569 = vmatmul.mubr.f32.gmra.mxu0 %v2433
        %v2570 = vpop.f32.mrf.mxu0
        %v2571 = vadd.f32 0.0, %v2570
        %v2572 = vpop.f32.mrf.mxu0
        %2573 = vmatprep.mubr.f32.mxu0 0.0
        %2574 = vmatmul.mubr.f32.gmra.mxu0 %v2436
        %v2575 = vpop.f32.mrf.mxu0
        %v2576 = vadd.f32 0.0, %v2575
        %v2577 = vpop.f32.mrf.mxu0
        %2578 = vmatprep.mubr.f32.mxu0 0.0
        %2579 = vmatmul.mubr.f32.gmra.mxu0 %v2439
        %v2580 = vpop.f32.mrf.mxu0
        %v2581 = vadd.f32 0.0, %v2580
        %v2582 = vpop.f32.mrf.mxu0
        %2583 = vmatprep.mubr.f32.mxu0 0.0
        %2584 = vmatmul.mubr.f32.gmra.mxu0 %v2442
        %v2585 = vpop.f32.mrf.mxu0
        %v2586 = vadd.f32 0.0, %v2585
        %v2587 = vpop.f32.mrf.mxu0
        %2588 = vdwg.mxu0
        %2589 = vmatprep.subr.mxu0 0.0
        %2590 = vmatpush1.msra.mxu0 0.0
        %2591 = vmatprep.subr.mxu0 0.0
        %2592 = vmatpush1.msra.mxu0 0.0
        %2593 = vmatprep.subr.mxu0 0.0
        %2594 = vmatpush1.msra.mxu0 0.0
        %2595 = vmatprep.subr.mxu0 0.0
        %2596 = vmatpush1.msra.mxu0 0.0
        %2597 = vmatprep.subr.mxu0 0.0
        %2598 = vmatpush1.msra.mxu0 0.0
        %2599 = vmatprep.subr.mxu0 0.0
        %2600 = vmatpush1.msra.mxu0 0.0
        %2601 = vmatprep.subr.mxu0 0.0
        %2602 = vmatpush1.msra.mxu0 0.0
        %2603 = vmatprep.subr.mxu0 0.0
        %2604 = vmatpush1.msra.mxu0 0.0
        %2605 = vmatprep.subr.mxu0 0.0
        %2606 = vmatpush1.msra.mxu0 %v465
        %2607 = vmatprep.subr.mxu0 0.0
        %2608 = vmatpush1.msra.mxu0 %v464
        %2609 = vmatprep.subr.mxu0 0.0
        %2610 = vmatpush1.msra.mxu0 %v463
        %2611 = vmatprep.subr.mxu0 0.0
        %2612 = vmatpush1.msra.mxu0 %v462
        %2613 = vmatprep.subr.mxu0 0.0
        %2614 = vmatpush1.msra.mxu0 %v461
        %2615 = vmatprep.subr.mxu0 0.0
        %2616 = vmatpush1.msra.mxu0 %v460
        %2617 = vmatprep.subr.mxu0 0.0
        %2618 = vmatpush1.msra.mxu0 %v459
        %2619 = vmatprep.subr.mxu0 0.0
        %2620 = vmatpush1.msra.mxu0 %v458
        %2621 = vmatprep.subr.mxu0 0.0
        %2622 = vmatpush2.msra.mxu0 0.0
        %2623 = vmatprep.subr.mxu0 0.0
        %2624 = vmatpush2.msra.mxu0 0.0
        %2625 = vmatprep.subr.mxu0 0.0
        %2626 = vmatpush2.msra.mxu0 0.0
        %2627 = vmatprep.subr.mxu0 0.0
        %2628 = vmatpush2.msra.mxu0 0.0
        %2629 = vmatprep.subr.mxu0 0.0
        %2630 = vmatpush2.msra.mxu0 0.0
        %2631 = vmatprep.subr.mxu0 0.0
        %2632 = vmatpush2.msra.mxu0 0.0
        %2633 = vmatprep.subr.mxu0 0.0
        %2634 = vmatpush2.msra.mxu0 0.0
        %2635 = vmatprep.subr.mxu0 0.0
        %2636 = vmatpush2.msra.mxu0 0.0
        %2637 = vmatprep.subr.mxu0 0.0
        %2638 = vmatpush2.msra.mxu0 0.0
        %2639 = vmatprep.subr.mxu0 0.0
        %2640 = vmatpush2.msra.mxu0 0.0
        %2641 = vmatprep.subr.mxu0 0.0
        %2642 = vmatpush2.msra.mxu0 0.0
        %2643 = vmatprep.subr.mxu0 0.0
        %2644 = vmatpush2.msra.mxu0 0.0
        %2645 = vmatprep.subr.mxu0 0.0
        %2646 = vmatpush2.msra.mxu0 0.0
        %2647 = vmatprep.subr.mxu0 0.0
        %2648 = vmatpush2.msra.mxu0 0.0
        %2649 = vmatprep.subr.mxu0 0.0
        %2650 = vmatpush2.msra.mxu0 0.0
        %2651 = vmatprep.subr.mxu0 0.0
        %2652 = vmatpush2.msra.mxu0 0.0
        %2653 = vmatprep.mubr.f32.mxu0 0.0
        %2654 = vmatmul.mubr.f32.gmra.mxu0 %v2397
        %v2655 = vpop.f32.mrf.mxu0
        %v2656 = vadd.f32 0.0, %v2655
        %v2657 = vpop.f32.mrf.mxu0
        %2658 = vmatprep.mubr.f32.mxu0 0.0
        %2659 = vmatmul.mubr.f32.gmra.mxu0 %v2400
        %v2660 = vpop.f32.mrf.mxu0
        %v2661 = vadd.f32 0.0, %v2660
        %v2662 = vpop.f32.mrf.mxu0
        %2663 = vmatprep.mubr.f32.mxu0 0.0
        %2664 = vmatmul.mubr.f32.gmra.mxu0 %v2403
        %v2665 = vpop.f32.mrf.mxu0
        %v2666 = vadd.f32 0.0, %v2665
        %v2667 = vpop.f32.mrf.mxu0
        %2668 = vmatprep.mubr.f32.mxu0 0.0
        %2669 = vmatmul.mubr.f32.gmra.mxu0 %v2406
        %v2670 = vpop.f32.mrf.mxu0
        %v2671 = vadd.f32 0.0, %v2670
        %v2672 = vpop.f32.mrf.mxu0
        %2673 = vmatprep.mubr.f32.mxu0 0.0
        %2674 = vmatmul.mubr.f32.gmra.mxu0 %v2409
        %v2675 = vpop.f32.mrf.mxu0
        %v2676 = vadd.f32 0.0, %v2675
        %v2677 = vpop.f32.mrf.mxu0
        %2678 = vmatprep.mubr.f32.mxu0 0.0
        %2679 = vmatmul.mubr.f32.gmra.mxu0 %v2412
        %v2680 = vpop.f32.mrf.mxu0
        %v2681 = vadd.f32 0.0, %v2680
        %v2682 = vpop.f32.mrf.mxu0
        %2683 = vmatprep.mubr.f32.mxu0 0.0
        %2684 = vmatmul.mubr.f32.gmra.mxu0 %v2415
        %v2685 = vpop.f32.mrf.mxu0
        %v2686 = vadd.f32 0.0, %v2685
        %v2687 = vpop.f32.mrf.mxu0
        %2688 = vmatprep.mubr.f32.mxu0 0.0
        %2689 = vmatmul.mubr.f32.gmra.mxu0 %v2418
        %v2690 = vpop.f32.mrf.mxu0
        %v2691 = vadd.f32 0.0, %v2690
        %v2692 = vpop.f32.mrf.mxu0
        %2693 = vmatprep.mubr.f32.mxu0 0.0
        %2694 = vmatmul.mubr.f32.gmra.mxu0 %v2421
        %v2695 = vpop.f32.mrf.mxu0
        %v2696 = vadd.f32 0.0, %v2695
        %v2697 = vpop.f32.mrf.mxu0
        %2698 = vmatprep.mubr.f32.mxu0 0.0
        %2699 = vmatmul.mubr.f32.gmra.mxu0 %v2424
        %v2700 = vpop.f32.mrf.mxu0
        %v2701 = vadd.f32 0.0, %v2700
        %v2702 = vpop.f32.mrf.mxu0
        %2703 = vmatprep.mubr.f32.mxu0 0.0
        %2704 = vmatmul.mubr.f32.gmra.mxu0 %v2427
        %v2705 = vpop.f32.mrf.mxu0
        %v2706 = vadd.f32 0.0, %v2705
        %v2707 = vpop.f32.mrf.mxu0
        %2708 = vmatprep.mubr.f32.mxu0 0.0
        %2709 = vmatmul.mubr.f32.gmra.mxu0 %v2430
        %v2710 = vpop.f32.mrf.mxu0
        %v2711 = vadd.f32 0.0, %v2710
        %v2712 = vpop.f32.mrf.mxu0
        %2713 = vmatprep.mubr.f32.mxu0 0.0
        %2714 = vmatmul.mubr.f32.gmra.mxu0 %v2433
        %v2715 = vpop.f32.mrf.mxu0
        %v2716 = vadd.f32 0.0, %v2715
        %v2717 = vpop.f32.mrf.mxu0
        %2718 = vmatprep.mubr.f32.mxu0 0.0
        %2719 = vmatmul.mubr.f32.gmra.mxu0 %v2436
        %v2720 = vpop.f32.mrf.mxu0
        %v2721 = vadd.f32 0.0, %v2720
        %v2722 = vpop.f32.mrf.mxu0
        %2723 = vmatprep.mubr.f32.mxu0 0.0
        %2724 = vmatmul.mubr.f32.gmra.mxu0 %v2439
        %v2725 = vpop.f32.mrf.mxu0
        %v2726 = vadd.f32 0.0, %v2725
        %v2727 = vpop.f32.mrf.mxu0
        %2728 = vmatprep.mubr.f32.mxu0 0.0
        %2729 = vmatmul.mubr.f32.gmra.mxu0 %v2442
        %v2730 = vpop.f32.mrf.mxu0
        %v2731 = vadd.f32 0.0, %v2730
        %v2732 = vpop.f32.mrf.mxu0
        %2733 = vdwg.mxu0
        %v2734 = vmul.f32 %v634, %v2511
        %v2735 = vmul.f32 %v639, %v2516
        %v2736 = vmul.f32 %v644, %v2521
        %v2737 = vmul.f32 %v649, %v2526
        %v2738 = vmul.f32 %v654, %v2531
        %v2739 = vmul.f32 %v659, %v2536
        %v2740 = vmul.f32 %v664, %v2541
        %v2741 = vmul.f32 %v669, %v2546
        %v2742 = vmul.f32 %v674, %v2551
        %v2743 = vmul.f32 %v679, %v2556
        %v2744 = vmul.f32 %v684, %v2561
        %v2745 = vmul.f32 %v689, %v2566
        %v2746 = vmul.f32 %v694, %v2571
        %v2747 = vmul.f32 %v699, %v2576
        %v2748 = vmul.f32 %v704, %v2581
        %v2749 = vmul.f32 %v709, %v2586
        %2750 = vmatprep.subr.mxu0 0.0
        %2751 = vmatpush1.msra.mxu0 %v2731
        %2752 = vmatprep.subr.mxu0 0.0
        %2753 = vmatpush1.msra.mxu0 %v2726
        %2754 = vmatprep.subr.mxu0 0.0
        %2755 = vmatpush1.msra.mxu0 %v2721
        %2756 = vmatprep.subr.mxu0 0.0
        %2757 = vmatpush1.msra.mxu0 %v2716
        %2758 = vmatprep.subr.mxu0 0.0
        %2759 = vmatpush1.msra.mxu0 %v2711
        %2760 = vmatprep.subr.mxu0 0.0
        %2761 = vmatpush1.msra.mxu0 %v2706
        %2762 = vmatprep.subr.mxu0 0.0
        %2763 = vmatpush1.msra.mxu0 %v2701
        %2764 = vmatprep.subr.mxu0 0.0
        %2765 = vmatpush1.msra.mxu0 %v2696
        %2766 = vmatprep.subr.mxu0 0.0
        %2767 = vmatpush1.msra.mxu0 %v2691
        %2768 = vmatprep.subr.mxu0 0.0
        %2769 = vmatpush1.msra.mxu0 %v2686
        %2770 = vmatprep.subr.mxu0 0.0
        %2771 = vmatpush1.msra.mxu0 %v2681
        %2772 = vmatprep.subr.mxu0 0.0
        %2773 = vmatpush1.msra.mxu0 %v2676
        %2774 = vmatprep.subr.mxu0 0.0
        %2775 = vmatpush1.msra.mxu0 %v2671
        %2776 = vmatprep.subr.mxu0 0.0
        %2777 = vmatpush1.msra.mxu0 %v2666
        %2778 = vmatprep.subr.mxu0 0.0
        %2779 = vmatpush1.msra.mxu0 %v2661
        %2780 = vmatprep.subr.mxu0 0.0
        %2781 = vmatpush1.msra.mxu0 %v2656
        %2782 = vmatprep.subr.mxu0 0.0
        %2783 = vmatpush2.msra.mxu0 0.0
        %2784 = vmatprep.subr.mxu0 0.0
        %2785 = vmatpush2.msra.mxu0 0.0
        %2786 = vmatprep.subr.mxu0 0.0
        %2787 = vmatpush2.msra.mxu0 0.0
        %2788 = vmatprep.subr.mxu0 0.0
        %2789 = vmatpush2.msra.mxu0 0.0
        %2790 = vmatprep.subr.mxu0 0.0
        %2791 = vmatpush2.msra.mxu0 0.0
        %2792 = vmatprep.subr.mxu0 0.0
        %2793 = vmatpush2.msra.mxu0 0.0
        %2794 = vmatprep.subr.mxu0 0.0
        %2795 = vmatpush2.msra.mxu0 0.0
        %2796 = vmatprep.subr.mxu0 0.0
        %2797 = vmatpush2.msra.mxu0 0.0
        %2798 = vmatprep.subr.mxu0 0.0
        %2799 = vmatpush2.msra.mxu0 0.0
        %2800 = vmatprep.subr.mxu0 0.0
        %2801 = vmatpush2.msra.mxu0 0.0
        %2802 = vmatprep.subr.mxu0 0.0
        %2803 = vmatpush2.msra.mxu0 0.0
        %2804 = vmatprep.subr.mxu0 0.0
        %2805 = vmatpush2.msra.mxu0 0.0
        %2806 = vmatprep.subr.mxu0 0.0
        %2807 = vmatpush2.msra.mxu0 0.0
        %2808 = vmatprep.subr.mxu0 0.0
        %2809 = vmatpush2.msra.mxu0 0.0
        %2810 = vmatprep.subr.mxu0 0.0
        %2811 = vmatpush2.msra.mxu0 0.0
        %2812 = vmatprep.subr.mxu0 0.0
        %2813 = vmatpush2.msra.mxu0 0.0
        %2814 = vmatprep.mubr.f32.mxu0 0.0
        %2815 = vmatmul.mubr.f32.gmra.mxu0 %v424
        %v2816 = vpop.f32.mrf.mxu0
        %v2817 = vadd.f32 0.0, %v2816
        %v2818 = vpop.f32.mrf.mxu0
        %2819 = vmatprep.mubr.f32.mxu0 0.0
        %2820 = vmatmul.mubr.f32.gmra.mxu0 %v425
        %v2821 = vpop.f32.mrf.mxu0
        %v2822 = vadd.f32 0.0, %v2821
        %v2823 = vpop.f32.mrf.mxu0
        %2824 = vmatprep.mubr.f32.mxu0 0.0
        %2825 = vmatmul.mubr.f32.gmra.mxu0 %v426
        %v2826 = vpop.f32.mrf.mxu0
        %v2827 = vadd.f32 0.0, %v2826
        %v2828 = vpop.f32.mrf.mxu0
        %2829 = vmatprep.mubr.f32.mxu0 0.0
        %2830 = vmatmul.mubr.f32.gmra.mxu0 %v427
        %v2831 = vpop.f32.mrf.mxu0
        %v2832 = vadd.f32 0.0, %v2831
        %v2833 = vpop.f32.mrf.mxu0
        %2834 = vmatprep.mubr.f32.mxu0 0.0
        %2835 = vmatmul.mubr.f32.gmra.mxu0 %v428
        %v2836 = vpop.f32.mrf.mxu0
        %v2837 = vadd.f32 0.0, %v2836
        %v2838 = vpop.f32.mrf.mxu0
        %2839 = vmatprep.mubr.f32.mxu0 0.0
        %2840 = vmatmul.mubr.f32.gmra.mxu0 %v429
        %v2841 = vpop.f32.mrf.mxu0
        %v2842 = vadd.f32 0.0, %v2841
        %v2843 = vpop.f32.mrf.mxu0
        %2844 = vmatprep.mubr.f32.mxu0 0.0
        %2845 = vmatmul.mubr.f32.gmra.mxu0 %v430
        %v2846 = vpop.f32.mrf.mxu0
        %v2847 = vadd.f32 0.0, %v2846
        %v2848 = vpop.f32.mrf.mxu0
        %2849 = vmatprep.mubr.f32.mxu0 0.0
        %2850 = vmatmul.mubr.f32.gmra.mxu0 %v431
        %v2851 = vpop.f32.mrf.mxu0
        %v2852 = vadd.f32 0.0, %v2851
        %v2853 = vpop.f32.mrf.mxu0
        %2854 = vmatprep.mubr.f32.mxu0 0.0
        %2855 = vmatmul.mubr.f32.gmra.mxu0 %v432
        %v2856 = vpop.f32.mrf.mxu0
        %v2857 = vadd.f32 0.0, %v2856
        %v2858 = vpop.f32.mrf.mxu0
        %2859 = vmatprep.mubr.f32.mxu0 0.0
        %2860 = vmatmul.mubr.f32.gmra.mxu0 %v433
        %v2861 = vpop.f32.mrf.mxu0
        %v2862 = vadd.f32 0.0, %v2861
        %v2863 = vpop.f32.mrf.mxu0
        %2864 = vmatprep.mubr.f32.mxu0 0.0
        %2865 = vmatmul.mubr.f32.gmra.mxu0 %v434
        %v2866 = vpop.f32.mrf.mxu0
        %v2867 = vadd.f32 0.0, %v2866
        %v2868 = vpop.f32.mrf.mxu0
        %2869 = vmatprep.mubr.f32.mxu0 0.0
        %2870 = vmatmul.mubr.f32.gmra.mxu0 %v435
        %v2871 = vpop.f32.mrf.mxu0
        %v2872 = vadd.f32 0.0, %v2871
        %v2873 = vpop.f32.mrf.mxu0
        %2874 = vmatprep.mubr.f32.mxu0 0.0
        %2875 = vmatmul.mubr.f32.gmra.mxu0 %v436
        %v2876 = vpop.f32.mrf.mxu0
        %v2877 = vadd.f32 0.0, %v2876
        %v2878 = vpop.f32.mrf.mxu0
        %2879 = vmatprep.mubr.f32.mxu0 0.0
        %2880 = vmatmul.mubr.f32.gmra.mxu0 %v437
        %v2881 = vpop.f32.mrf.mxu0
        %v2882 = vadd.f32 0.0, %v2881
        %v2883 = vpop.f32.mrf.mxu0
        %2884 = vmatprep.mubr.f32.mxu0 0.0
        %2885 = vmatmul.mubr.f32.gmra.mxu0 %v438
        %v2886 = vpop.f32.mrf.mxu0
        %v2887 = vadd.f32 0.0, %v2886
        %v2888 = vpop.f32.mrf.mxu0
        %2889 = vmatprep.mubr.f32.mxu0 0.0
        %2890 = vmatmul.mubr.f32.gmra.mxu0 %v439
        %v2891 = vpop.f32.mrf.mxu0
        %v2892 = vadd.f32 0.0, %v2891
        %v2893 = vpop.f32.mrf.mxu0
        %2894 = vdwg.mxu0
        %v2895 = vadd.f32 %v2734, %v2817
        %v2896 = vadd.f32 %v2735, %v2822
        %v2897 = vadd.f32 %v2736, %v2827
        %v2898 = vadd.f32 %v2737, %v2832
        %v2899 = vadd.f32 %v2738, %v2837
        %v2900 = vadd.f32 %v2739, %v2842
        %v2901 = vadd.f32 %v2740, %v2847
        %v2902 = vadd.f32 %v2741, %v2852
        %v2903 = vadd.f32 %v2742, %v2857
        %v2904 = vadd.f32 %v2743, %v2862
        %v2905 = vadd.f32 %v2744, %v2867
        %v2906 = vadd.f32 %v2745, %v2872
        %v2907 = vadd.f32 %v2746, %v2877
        %v2908 = vadd.f32 %v2747, %v2882
        %v2909 = vadd.f32 %v2748, %v2887
        %v2910 = vadd.f32 %v2749, %v2892
        %v2911 = vmul.f32 %v2895, %v1694
        %v2912 = vmul.f32 %v2896, %v1694
        %v2913 = vmul.f32 %v2897, %v1694
        %v2914 = vmul.f32 %v2898, %v1694
        %v2915 = vmul.f32 %v2899, %v1694
        %v2916 = vmul.f32 %v2900, %v1694
        %v2917 = vmul.f32 %v2901, %v1694
        %v2918 = vmul.f32 %v2902, %v1694
        %v2919 = vmul.f32 %v2903, %v1694
        %v2920 = vmul.f32 %v2904, %v1694
        %v2921 = vmul.f32 %v2905, %v1694
        %v2922 = vmul.f32 %v2906, %v1694
        %v2923 = vmul.f32 %v2907, %v1694
        %v2924 = vmul.f32 %v2908, %v1694
        %v2925 = vmul.f32 %v2909, %v1694
        %v2926 = vmul.f32 %v2910, %v1694
        %v2927 = vadd.f32 %v2911, %v1716
        %v2928 = vadd.f32 %v2912, %v1716
        %v2929 = vadd.f32 %v2913, %v1716
        %v2930 = vadd.f32 %v2914, %v1716
        %v2931 = vadd.f32 %v2915, %v1716
        %v2932 = vadd.f32 %v2916, %v1716
        %v2933 = vadd.f32 %v2917, %v1716
        %v2934 = vadd.f32 %v2918, %v1716
        %v2935 = vadd.f32 %v2919, %v1716
        %v2936 = vadd.f32 %v2920, %v1716
        %v2937 = vadd.f32 %v2921, %v1716
        %v2938 = vadd.f32 %v2922, %v1716
        %v2939 = vadd.f32 %v2923, %v1716
        %v2940 = vadd.f32 %v2924, %v1716
        %v2941 = vadd.f32 %v2925, %v1716
        %v2942 = vadd.f32 %v2926, %v1716
        %v2943 = vmax.f32 %v2927, 0.0
        %v2944 = vmax.f32 %v2928, 0.0
        %v2945 = vmax.f32 %v2929, 0.0
        %v2946 = vmax.f32 %v2930, 0.0
        %v2947 = vmax.f32 %v2931, 0.0
        %v2948 = vmax.f32 %v2932, 0.0
        %v2949 = vmax.f32 %v2933, 0.0
        %v2950 = vmax.f32 %v2934, 0.0
        %v2951 = vmax.f32 %v2935, 0.0
        %v2952 = vmax.f32 %v2936, 0.0
        %v2953 = vmax.f32 %v2937, 0.0
        %v2954 = vmax.f32 %v2938, 0.0
        %v2955 = vmax.f32 %v2939, 0.0
        %v2956 = vmax.f32 %v2940, 0.0
        %v2957 = vmax.f32 %v2941, 0.0
        %v2958 = vmax.f32 %v2942, 0.0
        %v2959 = vadd.f32 %v1785, %v2943
        %v2960 = vadd.f32 %v1786, %v2944
        %v2961 = vadd.f32 %v1787, %v2945
        %v2962 = vadd.f32 %v1788, %v2946
        %v2963 = vadd.f32 %v1789, %v2947
        %v2964 = vadd.f32 %v1790, %v2948
        %v2965 = vadd.f32 %v1791, %v2949
        %v2966 = vadd.f32 %v1792, %v2950
        %v2967 = vadd.f32 %v1793, %v2951
        %v2968 = vadd.f32 %v1794, %v2952
        %v2969 = vadd.f32 %v1795, %v2953
        %v2970 = vadd.f32 %v1796, %v2954
        %v2971 = vadd.f32 %v1797, %v2955
        %v2972 = vadd.f32 %v1798, %v2956
        %v2973 = vadd.f32 %v1799, %v2957
        %v2974 = vadd.f32 %v1800, %v2958
        %s2975 = scalar_lea.vmem %s405, %s1783 [#allocation5]
        %2976 = vst.msk [vmem:[%s2975] sm:$0xff] %vm727, %v2959
        %2977 = vst.msk [vmem:[%s2975 + $0x8] sm:$0xff] %vm727, %v2960
        %2978 = vst.msk [vmem:[%s2975 + $0x10] sm:$0xff] %vm727, %v2961
        %2979 = vst.msk [vmem:[%s2975 + $0x18] sm:$0xff] %vm727, %v2962
        %2980 = vst.msk [vmem:[%s2975 + $0x20] sm:$0xff] %vm727, %v2963
        %2981 = vst.msk [vmem:[%s2975 + $0x28] sm:$0xff] %vm727, %v2964
        %2982 = vst.msk [vmem:[%s2975 + $0x30] sm:$0xff] %vm727, %v2965
        %2983 = vst.msk [vmem:[%s2975 + $0x38] sm:$0xff] %vm727, %v2966
        %2984 = vst.msk [vmem:[%s2975 + $0x40] sm:$0xff] %vm727, %v2967
        %2985 = vst.msk [vmem:[%s2975 + $0x48] sm:$0xff] %vm727, %v2968
        %2986 = vst.msk [vmem:[%s2975 + $0x50] sm:$0xff] %vm727, %v2969
        %2987 = vst.msk [vmem:[%s2975 + $0x58] sm:$0xff] %vm727, %v2970
        %2988 = vst.msk [vmem:[%s2975 + $0x60] sm:$0xff] %vm727, %v2971
        %2989 = vst.msk [vmem:[%s2975 + $0x68] sm:$0xff] %vm727, %v2972
        %2990 = vst.msk [vmem:[%s2975 + $0x70] sm:$0xff] %vm727, %v2973
        %2991 = vst.msk [vmem:[%s2975 + $0x78] sm:$0xff] %vm727, %v2974
        %s2992 = sand.u32 %s272, 1
        %s2993 = scalar_lea.sflag [#allocation4], %s2992
        %s2994 = sand.u32 %s272, 1
        %s2995 = smul.addr %s2994, 256
        %s2996 = scalar_lea.vmem [#allocation5], %s2995
        // Predicated region
        $region69: #{tpu_custom_call.1} parent=63 // pred_check
          %p2997 = pneg %p282
        $region70: #{tpu_custom_call.1} parent=63 // pred_check_branch
          %2999 = sbr.rel (%p2997) target = $region72
        $region71: #{tpu_custom_call.1} parent=63 // pred_region
          %s3000 = smul.u32 16, %s28
          %s3002 = ssub.s32 4096, 4096
          %3003 = vsyncadd %s2993, %s3002
          %s3004 = smul.addr %s3000, 2
          %s3005 = smul.addr %s3004, 128
          %s3006 = scalar_lea.hbm %s11, %s3005
          %s3007 = sshll.u32 %s2996, 4
          %s3008 = int_to_ptr.vmem [resolvable:$true] %s3007
          %3013 = dma.vmem_to_hbm [thread:$0]  %s3008, 4096, %s3006, %s2993, 128, 128, 8
        $region72: #{tpu_custom_call.1} parent=63 // pred_fallthru
          _
      $region64: #{tpu_custom_call.1} parent=5 // pred_fallthru
        _
      %p3014 = scmp.le.s32.totalorder 2, %s23
      // Predicated region
      $region73: #{tpu_custom_call.1} parent=5 // pred_check
        %p3015 = pneg %p3014
      $region74: #{tpu_custom_call.1} parent=5 // pred_check_branch
        %3017 = sbr.rel (%p3015) target = $region76
      $region75: #{tpu_custom_call.1} parent=5 // pred_region
        %s3018 = ssub.s32 %s23, 2
        // Predicated region
        $region77: #{tpu_custom_call.1} parent=75 // pred_check
          %p3019 = pneg %p288
        $region78: #{tpu_custom_call.1} parent=75 // pred_check_branch
          %3021 = sbr.rel (%p3019) target = $region80
        $region79: #{tpu_custom_call.1} parent=75 // pred_region
          %s3022 = sand.u32 %s273, 1
          %s3023 = scalar_lea.sflag [#allocation4], %s3022
          %s3024 = sand.u32 %s273, 1
          %s3025 = smul.addr %s3024, 256
          %s3026 = scalar_lea.vmem [#allocation5], %s3025
          %3027 = dma.done %s3023, 4096
        $region80: #{tpu_custom_call.1} parent=75 // pred_fallthru
          _
      $region76: #{tpu_custom_call.1} parent=5 // pred_fallthru
        _
    $region6: #{tpu_custom_call.1} parent=1 // loop_footer
      %s27 = sadd.s32 1, %s23
    $region7: #{tpu_custom_call.1} parent=1 // loop_footer_branch
      %22 = sbr.rel target = $region3
    $region8: #{tpu_custom_call.1} parent=1 // loop_exit
      _
    %3028 = vsyncpa [#allocation3], 1
    %s3029 = scalar_lea.sflag [#allocation3], 1
    %3030 = vsyncpa %s3029, 1
    %3031 = vsyncpa [#allocation4], 1
    %s3032 = scalar_lea.sflag [#allocation4], 1
    %3033 = vsyncpa %s3032, 1

</llo_original>
